<compile_context>
chip_gen: v6e
topology: v6e:2x2x1
jax: 0.10.0
libtpu: 0.0.40
codegen_flags: <defaults>
</compile_context>

<pallas_src>
import jax
import jax.numpy as jnp
import numpy as np
from jax.experimental import pallas as pl
from jax.experimental.pallas import tpu as pltpu


# ---------------------------------------------------------------------------
# Division-free Newton roots (VPU only; keeps the single-slot EUP free).
# Seed via the classic exponent bit-hack, done in *float* arithmetic so no
# integer division is needed (i32 bit patterns ~1e9 round-trip through f32
# with negligible error for a seed).
# ---------------------------------------------------------------------------
_EXP_BIAS = (127.0 - 0.0450466) * float(2 ** 23)   # (127 - sigma) * 2^23
_CBRT_MAGIC = (4.0 / 3.0) * _EXP_BIAS              # seed for x^(-1/3)
_FIFTH_MAGIC = (6.0 / 5.0) * _EXP_BIAS             # seed for x^(-1/5)


def _bits_as_f32(x):
    return pltpu.bitcast(x, jnp.int32).astype(jnp.float32)


def _f32_from_bits(i_f32):
    return pltpu.bitcast(i_f32.astype(jnp.int32), jnp.float32)


def _inv_cbrt(x):
    """x^(-1/3), x in ~[8.8e-3, 1.1]: bit-hack seed + 2 Newton steps (~1e-5 rel)."""
    z = _f32_from_bits(_CBRT_MAGIC - _bits_as_f32(x) * (1.0 / 3.0))
    for _ in range(2):
        z = z * (4.0 - x * z * z * z) * (1.0 / 3.0)
    return z


def _cbrt(x):
    z = _inv_cbrt(x)
    return x * z * z                       # x * x^(-2/3) = x^(1/3)


def _inv_5th_root(x):
    """x^(-1/5), x in ~[2.7e-3, 1]: bit-hack seed + 2 Newton steps (~2e-4 rel)."""
    z = _f32_from_bits(_FIFTH_MAGIC - _bits_as_f32(x) * (1.0 / 5.0))
    for _ in range(2):
        z2 = z * z
        z = z * (6.0 - x * z2 * z2 * z) * (1.0 / 5.0)
    return z


def _srgb_inverse_gamma(c01):
    """sRGB de-gamma on [0,1].  pow(u,2.4) = u^2 * (u^2)^(1/5), Newton-based."""
    u = (c01 + 0.055) * (1.0 / 1.055)      # u >= 0.052 -> always well-posed
    v = u * u
    z = _inv_5th_root(v)
    z2 = z * z
    pw = v * v * z2 * z2                   # v^2 * z^4 = u^2.4
    return jnp.where(c01 <= 0.04045, c01 * (1.0 / 12.92), pw)


# D65 white point folded directly into the X / Z matrix rows.
_XW = 0.950456
_ZW = 1.088754


def multicolor_kernel(x_ref, o_ref):
    # x_ref : (TH, TW) int32  -- pixel packed as R | G<<8 | B<<16 (lane-dense)
    # o_ref : (12, TH, TW) uint8 planar  [R,G,B, Y,U,V, H,S,V, L,a,b]
    w = x_ref[...]
    r = (w & 0xFF).astype(jnp.float32)
    g = ((w >> 8) & 0xFF).astype(jnp.float32)
    b = ((w >> 16) & 0xFF).astype(jnp.float32)

    def store(c, x):
        # cv2-style: round to nearest (ties-to-even == cvRound), saturate, u8.
        o_ref[c, :, :] = jnp.clip(jnp.round(x), 0.0, 255.0).astype(jnp.uint8)

    # ---------------- RGB passthrough (exact integers -> bit-exact) --------
    store(0, r)
    store(1, g)
    store(2, b)

    # ---------------- YUV (cv2.COLOR_RGB2YUV, 8-bit) -----------------------
    y = 0.299 * r + 0.587 * g + 0.114 * b
    store(3, y)
    store(4, 0.492 * (b - y) + 128.0)
    store(5, 0.877 * (r - y) + 128.0)

    # ---------------- HSV (cv2.COLOR_RGB2HSV, 8-bit, H in [0,180)) ---------
    mx = jnp.maximum(jnp.maximum(r, g), b)
    mn = jnp.minimum(jnp.minimum(r, g), b)
    diff = mx - mn
    inv_diff = pl.reciprocal(jnp.where(diff > 0.0, diff, 1.0), approx=True)
    inv_mx = pl.reciprocal(jnp.where(mx > 0.0, mx, 1.0), approx=True)

    h = jnp.where(
        mx == r,
        60.0 * (g - b) * inv_diff,
        jnp.where(
            mx == g,
            120.0 + 60.0 * (b - r) * inv_diff,
            240.0 + 60.0 * (r - g) * inv_diff,
        ),
    )
    h = jnp.where(h < 0.0, h + 360.0, h)
    h = jnp.where(diff > 0.0, h * 0.5, 0.0)       # 8-bit: H /= 2
    s = jnp.where(mx > 0.0, diff * inv_mx * 255.0, 0.0)
    store(6, h)
    store(7, s)
    store(8, mx)

    # ---------------- Lab (cv2.COLOR_RGB2Lab, 8-bit) -----------------------
    rl = _srgb_inverse_gamma(r * (1.0 / 255.0))
    gl = _srgb_inverse_gamma(g * (1.0 / 255.0))
    bl = _srgb_inverse_gamma(b * (1.0 / 255.0))

    Xn = (0.412453 / _XW) * rl + (0.357580 / _XW) * gl + (0.180423 / _XW) * bl
    Y = 0.212671 * rl + 0.715160 * gl + 0.072169 * bl
    Zn = (0.019334 / _ZW) * rl + (0.119193 / _ZW) * gl + (0.950227 / _ZW) * bl

    def f(t):
        # Clamp keeps the Newton cbrt well-posed; the clamped branch is only
        # selected when t > 0.008856 anyway.
        cb = _cbrt(jnp.maximum(t, 0.008856))
        return jnp.where(t > 0.008856, cb, 7.787 * t + 16.0 / 116.0)

    fX, fY, fZ = f(Xn), f(Y), f(Zn)
    L = jnp.where(Y > 0.008856, 116.0 * fY - 16.0, 903.3 * Y)
    store(9, L * (255.0 / 100.0))
    store(10, 500.0 * (fX - fY) + 128.0)
    store(11, 200.0 * (fY - fZ) + 128.0)


def _round_up(x, m):
    return (x + m - 1) // m * m


def multicolor(img_u8, *, tile_rows=128, tile_cols=512, hwc=True):
    """(H, W, 3) uint8 RGB -> (H, W, 12) uint8 [RGB|YUV|HSV|Lab].

    hwc=False returns the planar (12, H, W) uint8 result directly (no final
    transpose) -- preferred when the consumer stays on TPU.
    """
    H, W, C = img_u8.shape
    assert C == 3 and img_u8.dtype == jnp.uint8

    # Fused de-interleave: pack RGB into one lane-dense int32 word per pixel.
    # Replaces the poorly-lowering uint8 HWC->CHW transpose; channels are
    # recovered with shift/and on the VPU inside the kernel.
    w32 = (
        img_u8[..., 0].astype(jnp.int32)
        | (img_u8[..., 1].astype(jnp.int32) << 8)
        | (img_u8[..., 2].astype(jnp.int32) << 16)
    )

    # Pad to native tiles: uint8 output wants (32, 128), int32 input (8, 128).
    Hp, Wp = _round_up(H, 32), _round_up(W, 128)
    if (Hp, Wp) != (H, W):
        w32 = jnp.pad(w32, ((0, Hp - H), (0, Wp - W)))

    TH = min(Hp, _round_up(tile_rows, 32))
    TW = min(Wp, _round_up(tile_cols, 128))
    grid = (pl.cdiv(Hp, TH), pl.cdiv(Wp, TW))

    out_planar = pl.pallas_call(
        multicolor_kernel,
        out_shape=jax.ShapeDtypeStruct((12, Hp, Wp), jnp.uint8),
        grid=grid,
        in_specs=[pl.BlockSpec((TH, TW), lambda i, j: (i, j))],
        out_specs=pl.BlockSpec((12, TH, TW), lambda i, j: (0, i, j)),
        compiler_params=pltpu.CompilerParams(
            # Rows/cols are fully independent.
            # TODO(synk): on v7x switch the row axis to pltpu.CORE_PARALLEL to
            # shard across its 2 TensorCores; plain PARALLEL is kept here as
            # it is safe on every generation.
            dimension_semantics=(pltpu.PARALLEL, pltpu.PARALLEL),
        ),
        cost_estimate=pl.CostEstimate(
            flops=240 * Hp * Wp,
            transcendentals=2 * Hp * Wp,     # only the two HSV reciprocals
            bytes_accessed=16 * Hp * Wp,     # 4 B/px in + 12 B/px out
        ),
    )(w32)

    out_planar = out_planar[:, :H, :W]
    if not hwc:
        return out_planar
    return jnp.transpose(out_planar, (1, 2, 0))


# ---------------------------------------------------------------------------
# Pure-numpy float64 reference (same formulas, exact pow/cbrt).
# ---------------------------------------------------------------------------
def multicolor_reference(img_u8):
    x = np.asarray(img_u8).astype(np.float64)
    r, g, b = x[..., 0], x[..., 1], x[..., 2]
    out = np.zeros(img_u8.shape[:2] + (12,), np.float64)
    out[..., 0:3] = x
    # YUV
    y = 0.299 * r + 0.587 * g + 0.114 * b
    out[..., 3] = y
    out[..., 4] = 0.492 * (b - y) + 128.0
    out[..., 5] = 0.877 * (r - y) + 128.0
    # HSV
    mx = np.maximum(np.maximum(r, g), b)
    mn = np.minimum(np.minimum(r, g), b)
    diff = mx - mn
    sd = np.where(diff > 0, diff, 1.0)
    h = np.where(
        mx == r, 60.0 * (g - b) / sd,
        np.where(mx == g, 120.0 + 60.0 * (b - r) / sd,
                 240.0 + 60.0 * (r - g) / sd))
    h = np.where(h < 0, h + 360.0, h)
    out[..., 6] = np.where(diff > 0, h * 0.5, 0.0)
    out[..., 7] = np.where(mx > 0, diff / np.where(mx > 0, mx, 1.0) * 255.0, 0.0)
    out[..., 8] = mx
    # Lab
    def srgb_inv(c):
        c = c / 255.0
        return np.where(c <= 0.04045, c / 12.92, ((c + 0.055) / 1.055) ** 2.4)
    rl, gl, bl = srgb_inv(r), srgb_inv(g), srgb_inv(b)
    X = (0.412453 * rl + 0.357580 * gl + 0.180423 * bl) / 0.950456
    Y = 0.212671 * rl + 0.715160 * gl + 0.072169 * bl
    Z = (0.019334 * rl + 0.119193 * gl + 0.950227 * bl) / 1.088754
    def f(t):
        return np.where(t > 0.008856, np.cbrt(t), 7.787 * t + 16.0 / 116.0)
    fX, fY, fZ = f(X), f(Y), f(Z)
    out[..., 9] = np.where(Y > 0.008856, 116.0 * fY - 16.0, 903.3 * Y) * 255.0 / 100.0
    out[..., 10] = 500.0 * (fX - fY) + 128.0
    out[..., 11] = 200.0 * (fY - fZ) + 128.0
    return np.clip(np.round(out), 0, 255).astype(np.uint8)


if __name__ == "__main__":
    key = jax.random.PRNGKey(0)
    H, W = 96, 256
    img = jax.random.randint(key, (H, W, 3), 0, 256, dtype=jnp.int32).astype(
        jnp.uint8
    )

    # tile 32x128 -> grid (3, 2): exercises the 2-D pipelined path.
    out = multicolor(img, tile_rows=32, tile_cols=128)
    out = jax.block_until_ready(out)

    assert out.shape == (H, W, 12) and out.dtype == jnp.uint8

    out_np = np.asarray(out)
    img_np = np.asarray(img)

    # RGB passthrough must be bit-exact.
    np.testing.assert_array_equal(out_np[..., :3], img_np)

    # YUV / HSV / Lab within +-1 LSB of the float64 reference (float/Newton
    # path vs exact math differs only at rounding boundaries).
    ref = multicolor_reference(img_np)
    diff = np.abs(out_np.astype(np.int32) - ref.astype(np.int32))
    max_diff = int(diff[..., 3:].max())
    assert max_diff <= 1, f"max |diff| vs reference = {max_diff}"

    # TODO(synk): OpenCV's 8-bit paths use fixed-point/LUT arithmetic; this
    # float implementation may still differ from cv2 by +-1 LSB at rounding
    # boundaries.
    print("KERNEL_OK")
</pallas_src>

<mosaic_0001>
module attributes {stable_mosaic.version = 11 : i64} {
  func.func @multicolor_kernel(%arg0: i32, %arg1: i32, %arg2: memref<32x128xi32, #tpu.memory_space<vmem>>, %arg3: memref<12x32x128xi8, #tpu.memory_space<vmem>>) attributes {dimension_semantics = [#tpu.dimension_semantics<parallel>, #tpu.dimension_semantics<parallel>], iteration_bounds = array<i64: 3, 2>, scalar_prefetch = 0 : i64, scratch_operands = 0 : i64, tpu.core_type = #tpu.core_type<tc>, window_params = [{transform_indices = @transform_0, window_bounds = array<i64: 32, 128>}, {transform_indices = @transform_1, window_bounds = array<i64: 12, 32, 128>}]} {
    %c0 = arith.constant 0 : index
    %c0_0 = arith.constant 0 : index
    %0 = vector.load %arg2[%c0, %c0_0] : memref<32x128xi32, #tpu.memory_space<vmem>>, vector<32x128xi32>
    %c255_i32 = arith.constant 255 : i32
    %1 = vector.broadcast %c255_i32 : i32 to vector<32x128xi32>
    %2 = arith.andi %0, %1 : vector<32x128xi32>
    %3 = arith.sitofp %2 : vector<32x128xi32> to vector<32x128xf32>
    %c8_i32 = arith.constant 8 : i32
    %4 = vector.broadcast %c8_i32 : i32 to vector<32x128xi32>
    %5 = arith.shrsi %0, %4 : vector<32x128xi32>
    %c255_i32_1 = arith.constant 255 : i32
    %6 = vector.broadcast %c255_i32_1 : i32 to vector<32x128xi32>
    %7 = arith.andi %5, %6 : vector<32x128xi32>
    %8 = arith.sitofp %7 : vector<32x128xi32> to vector<32x128xf32>
    %c16_i32 = arith.constant 16 : i32
    %9 = vector.broadcast %c16_i32 : i32 to vector<32x128xi32>
    %10 = arith.shrsi %0, %9 : vector<32x128xi32>
    %c255_i32_2 = arith.constant 255 : i32
    %11 = vector.broadcast %c255_i32_2 : i32 to vector<32x128xi32>
    %12 = arith.andi %10, %11 : vector<32x128xi32>
    %13 = arith.sitofp %12 : vector<32x128xi32> to vector<32x128xf32>
    %14 = math.roundeven %3 : vector<32x128xf32>
    %cst = arith.constant 0.000000e+00 : f32
    %cst_3 = arith.constant 2.550000e+02 : f32
    %15 = vector.broadcast %cst : f32 to vector<32x128xf32>
    %16 = arith.maximumf %15, %14 : vector<32x128xf32>
    %17 = vector.broadcast %cst_3 : f32 to vector<32x128xf32>
    %18 = arith.minimumf %17, %16 : vector<32x128xf32>
    %19 = arith.fptoui %18 : vector<32x128xf32> to vector<32x128xi8>
    %c0_4 = arith.constant 0 : index
    %c0_5 = arith.constant 0 : index
    %c0_6 = arith.constant 0 : index
    %20 = vector.load %arg3[%c0_4, %c0_5, %c0_6] : memref<12x32x128xi8, #tpu.memory_space<vmem>>, vector<1x32x128xi8>
    %21 = vector.shape_cast %20 : vector<1x32x128xi8> to vector<32x128xi8>
    %22 = vector.shape_cast %19 : vector<32x128xi8> to vector<1x32x128xi8>
    tpu.vector_store %arg3[%c0_4, %c0_5, %c0_6], %22 {strides = array<i32>} : memref<12x32x128xi8, #tpu.memory_space<vmem>>, vector<1x32x128xi8>,
    %23 = math.roundeven %8 : vector<32x128xf32>
    %cst_7 = arith.constant 0.000000e+00 : f32
    %cst_8 = arith.constant 2.550000e+02 : f32
    %24 = vector.broadcast %cst_7 : f32 to vector<32x128xf32>
    %25 = arith.maximumf %24, %23 : vector<32x128xf32>
    %26 = vector.broadcast %cst_8 : f32 to vector<32x128xf32>
    %27 = arith.minimumf %26, %25 : vector<32x128xf32>
    %28 = arith.fptoui %27 : vector<32x128xf32> to vector<32x128xi8>
    %c1 = arith.constant 1 : index
    %c0_9 = arith.constant 0 : index
    %c0_10 = arith.constant 0 : index
    %29 = vector.load %arg3[%c1, %c0_9, %c0_10] : memref<12x32x128xi8, #tpu.memory_space<vmem>>, vector<1x32x128xi8>
    %30 = vector.shape_cast %29 : vector<1x32x128xi8> to vector<32x128xi8>
    %31 = vector.shape_cast %28 : vector<32x128xi8> to vector<1x32x128xi8>
    tpu.vector_store %arg3[%c1, %c0_9, %c0_10], %31 {strides = array<i32>} : memref<12x32x128xi8, #tpu.memory_space<vmem>>, vector<1x32x128xi8>,
    %32 = math.roundeven %13 : vector<32x128xf32>
    %cst_11 = arith.constant 0.000000e+00 : f32
    %cst_12 = arith.constant 2.550000e+02 : f32
    %33 = vector.broadcast %cst_11 : f32 to vector<32x128xf32>
    %34 = arith.maximumf %33, %32 : vector<32x128xf32>
    %35 = vector.broadcast %cst_12 : f32 to vector<32x128xf32>
    %36 = arith.minimumf %35, %34 : vector<32x128xf32>
    %37 = arith.fptoui %36 : vector<32x128xf32> to vector<32x128xi8>
    %c2 = arith.constant 2 : index
    %c0_13 = arith.constant 0 : index
    %c0_14 = arith.constant 0 : index
    %38 = vector.load %arg3[%c2, %c0_13, %c0_14] : memref<12x32x128xi8, #tpu.memory_space<vmem>>, vector<1x32x128xi8>
    %39 = vector.shape_cast %38 : vector<1x32x128xi8> to vector<32x128xi8>
    %40 = vector.shape_cast %37 : vector<32x128xi8> to vector<1x32x128xi8>
    tpu.vector_store %arg3[%c2, %c0_13, %c0_14], %40 {strides = array<i32>} : memref<12x32x128xi8, #tpu.memory_space<vmem>>, vector<1x32x128xi8>,
    %cst_15 = arith.constant 2.990000e-01 : f32
    %41 = vector.broadcast %cst_15 : f32 to vector<32x128xf32>
    %42 = arith.mulf %41, %3 : vector<32x128xf32>
    %cst_16 = arith.constant 5.870000e-01 : f32
    %43 = vector.broadcast %cst_16 : f32 to vector<32x128xf32>
    %44 = arith.mulf %43, %8 : vector<32x128xf32>
    %45 = arith.addf %42, %44 : vector<32x128xf32>
    %cst_17 = arith.constant 1.140000e-01 : f32
    %46 = vector.broadcast %cst_17 : f32 to vector<32x128xf32>
    %47 = arith.mulf %46, %13 : vector<32x128xf32>
    %48 = arith.addf %45, %47 : vector<32x128xf32>
    %49 = math.roundeven %48 : vector<32x128xf32>
    %cst_18 = arith.constant 0.000000e+00 : f32
    %cst_19 = arith.constant 2.550000e+02 : f32
    %50 = vector.broadcast %cst_18 : f32 to vector<32x128xf32>
    %51 = arith.maximumf %50, %49 : vector<32x128xf32>
    %52 = vector.broadcast %cst_19 : f32 to vector<32x128xf32>
    %53 = arith.minimumf %52, %51 : vector<32x128xf32>
    %54 = arith.fptoui %53 : vector<32x128xf32> to vector<32x128xi8>
    %c3 = arith.constant 3 : index
    %c0_20 = arith.constant 0 : index
    %c0_21 = arith.constant 0 : index
    %55 = vector.load %arg3[%c3, %c0_20, %c0_21] : memref<12x32x128xi8, #tpu.memory_space<vmem>>, vector<1x32x128xi8>
    %56 = vector.shape_cast %55 : vector<1x32x128xi8> to vector<32x128xi8>
    %57 = vector.shape_cast %54 : vector<32x128xi8> to vector<1x32x128xi8>
    tpu.vector_store %arg3[%c3, %c0_20, %c0_21], %57 {strides = array<i32>} : memref<12x32x128xi8, #tpu.memory_space<vmem>>, vector<1x32x128xi8>,
    %58 = arith.subf %13, %48 : vector<32x128xf32>
    %cst_22 = arith.constant 4.920000e-01 : f32
    %59 = vector.broadcast %cst_22 : f32 to vector<32x128xf32>
    %60 = arith.mulf %59, %58 : vector<32x128xf32>
    %cst_23 = arith.constant 1.280000e+02 : f32
    %61 = vector.broadcast %cst_23 : f32 to vector<32x128xf32>
    %62 = arith.addf %60, %61 : vector<32x128xf32>
    %63 = math.roundeven %62 : vector<32x128xf32>
    %cst_24 = arith.constant 0.000000e+00 : f32
    %cst_25 = arith.constant 2.550000e+02 : f32
    %64 = vector.broadcast %cst_24 : f32 to vector<32x128xf32>
    %65 = arith.maximumf %64, %63 : vector<32x128xf32>
    %66 = vector.broadcast %cst_25 : f32 to vector<32x128xf32>
    %67 = arith.minimumf %66, %65 : vector<32x128xf32>
    %68 = arith.fptoui %67 : vector<32x128xf32> to vector<32x128xi8>
    %c4 = arith.constant 4 : index
    %c0_26 = arith.constant 0 : index
    %c0_27 = arith.constant 0 : index
    %69 = vector.load %arg3[%c4, %c0_26, %c0_27] : memref<12x32x128xi8, #tpu.memory_space<vmem>>, vector<1x32x128xi8>
    %70 = vector.shape_cast %69 : vector<1x32x128xi8> to vector<32x128xi8>
    %71 = vector.shape_cast %68 : vector<32x128xi8> to vector<1x32x128xi8>
    tpu.vector_store %arg3[%c4, %c0_26, %c0_27], %71 {strides = array<i32>} : memref<12x32x128xi8, #tpu.memory_space<vmem>>, vector<1x32x128xi8>,
    %72 = arith.subf %3, %48 : vector<32x128xf32>
    %cst_28 = arith.constant 0.876999974 : f32
    %73 = vector.broadcast %cst_28 : f32 to vector<32x128xf32>
    %74 = arith.mulf %73, %72 : vector<32x128xf32>
    %cst_29 = arith.constant 1.280000e+02 : f32
    %75 = vector.broadcast %cst_29 : f32 to vector<32x128xf32>
    %76 = arith.addf %74, %75 : vector<32x128xf32>
    %77 = math.roundeven %76 : vector<32x128xf32>
    %cst_30 = arith.constant 0.000000e+00 : f32
    %cst_31 = arith.constant 2.550000e+02 : f32
    %78 = vector.broadcast %cst_30 : f32 to vector<32x128xf32>
    %79 = arith.maximumf %78, %77 : vector<32x128xf32>
    %80 = vector.broadcast %cst_31 : f32 to vector<32x128xf32>
    %81 = arith.minimumf %80, %79 : vector<32x128xf32>
    %82 = arith.fptoui %81 : vector<32x128xf32> to vector<32x128xi8>
    %c5 = arith.constant 5 : index
    %c0_32 = arith.constant 0 : index
    %c0_33 = arith.constant 0 : index
    %83 = vector.load %arg3[%c5, %c0_32, %c0_33] : memref<12x32x128xi8, #tpu.memory_space<vmem>>, vector<1x32x128xi8>
    %84 = vector.shape_cast %83 : vector<1x32x128xi8> to vector<32x128xi8>
    %85 = vector.shape_cast %82 : vector<32x128xi8> to vector<1x32x128xi8>
    tpu.vector_store %arg3[%c5, %c0_32, %c0_33], %85 {strides = array<i32>} : memref<12x32x128xi8, #tpu.memory_space<vmem>>, vector<1x32x128xi8>,
    %86 = arith.maximumf %3, %8 : vector<32x128xf32>
    %87 = arith.maximumf %86, %13 : vector<32x128xf32>
    %88 = arith.minimumf %3, %8 : vector<32x128xf32>
    %89 = arith.minimumf %88, %13 : vector<32x128xf32>
    %90 = arith.subf %87, %89 : vector<32x128xf32>
    %cst_34 = arith.constant 0.000000e+00 : f32
    %91 = vector.broadcast %cst_34 : f32 to vector<32x128xf32>
    %92 = arith.cmpf ogt, %90, %91 : vector<32x128xf32>
    %cst_35 = arith.constant 1.000000e+00 : f32
    %93 = vector.broadcast %cst_35 : f32 to vector<32x128xf32>
    %94 = arith.select %92, %90, %93 : vector<32x128xi1>, vector<32x128xf32>
    %95 = tpu.reciprocal %94 {approx = true} : vector<32x128xf32> -> vector<32x128xf32>
    %cst_36 = arith.constant 0.000000e+00 : f32
    %96 = vector.broadcast %cst_36 : f32 to vector<32x128xf32>
    %97 = arith.cmpf ogt, %87, %96 : vector<32x128xf32>
    %cst_37 = arith.constant 1.000000e+00 : f32
    %98 = vector.broadcast %cst_37 : f32 to vector<32x128xf32>
    %99 = arith.select %97, %87, %98 : vector<32x128xi1>, vector<32x128xf32>
    %100 = tpu.reciprocal %99 {approx = true} : vector<32x128xf32> -> vector<32x128xf32>
    %101 = arith.cmpf oeq, %87, %3 : vector<32x128xf32>
    %102 = arith.subf %8, %13 : vector<32x128xf32>
    %cst_38 = arith.constant 6.000000e+01 : f32
    %103 = vector.broadcast %cst_38 : f32 to vector<32x128xf32>
    %104 = arith.mulf %103, %102 : vector<32x128xf32>
    %105 = arith.mulf %104, %95 : vector<32x128xf32>
    %106 = arith.cmpf oeq, %87, %8 : vector<32x128xf32>
    %107 = arith.subf %13, %3 : vector<32x128xf32>
    %cst_39 = arith.constant 6.000000e+01 : f32
    %108 = vector.broadcast %cst_39 : f32 to vector<32x128xf32>
    %109 = arith.mulf %108, %107 : vector<32x128xf32>
    %110 = arith.mulf %109, %95 : vector<32x128xf32>
    %cst_40 = arith.constant 1.200000e+02 : f32
    %111 = vector.broadcast %cst_40 : f32 to vector<32x128xf32>
    %112 = arith.addf %111, %110 : vector<32x128xf32>
    %113 = arith.subf %3, %8 : vector<32x128xf32>
    %cst_41 = arith.constant 6.000000e+01 : f32
    %114 = vector.broadcast %cst_41 : f32 to vector<32x128xf32>
    %115 = arith.mulf %114, %113 : vector<32x128xf32>
    %116 = arith.mulf %115, %95 : vector<32x128xf32>
    %cst_42 = arith.constant 2.400000e+02 : f32
    %117 = vector.broadcast %cst_42 : f32 to vector<32x128xf32>
    %118 = arith.addf %117, %116 : vector<32x128xf32>
    %119 = arith.select %106, %112, %118 : vector<32x128xi1>, vector<32x128xf32>
    %120 = arith.select %101, %105, %119 : vector<32x128xi1>, vector<32x128xf32>
    %cst_43 = arith.constant 0.000000e+00 : f32
    %121 = vector.broadcast %cst_43 : f32 to vector<32x128xf32>
    %122 = arith.cmpf olt, %120, %121 : vector<32x128xf32>
    %cst_44 = arith.constant 3.600000e+02 : f32
    %123 = vector.broadcast %cst_44 : f32 to vector<32x128xf32>
    %124 = arith.addf %120, %123 : vector<32x128xf32>
    %125 = arith.select %122, %124, %120 : vector<32x128xi1>, vector<32x128xf32>
    %cst_45 = arith.constant 0.000000e+00 : f32
    %126 = vector.broadcast %cst_45 : f32 to vector<32x128xf32>
    %127 = arith.cmpf ogt, %90, %126 : vector<32x128xf32>
    %cst_46 = arith.constant 5.000000e-01 : f32
    %128 = vector.broadcast %cst_46 : f32 to vector<32x128xf32>
    %129 = arith.mulf %125, %128 : vector<32x128xf32>
    %cst_47 = arith.constant 0.000000e+00 : f32
    %130 = vector.broadcast %cst_47 : f32 to vector<32x128xf32>
    %131 = arith.select %127, %129, %130 : vector<32x128xi1>, vector<32x128xf32>
    %cst_48 = arith.constant 0.000000e+00 : f32
    %132 = vector.broadcast %cst_48 : f32 to vector<32x128xf32>
    %133 = arith.cmpf ogt, %87, %132 : vector<32x128xf32>
    %134 = arith.mulf %90, %100 : vector<32x128xf32>
    %cst_49 = arith.constant 2.550000e+02 : f32
    %135 = vector.broadcast %cst_49 : f32 to vector<32x128xf32>
    %136 = arith.mulf %134, %135 : vector<32x128xf32>
    %cst_50 = arith.constant 0.000000e+00 : f32
    %137 = vector.broadcast %cst_50 : f32 to vector<32x128xf32>
    %138 = arith.select %133, %136, %137 : vector<32x128xi1>, vector<32x128xf32>
    %139 = math.roundeven %131 : vector<32x128xf32>
    %cst_51 = arith.constant 0.000000e+00 : f32
    %cst_52 = arith.constant 2.550000e+02 : f32
    %140 = vector.broadcast %cst_51 : f32 to vector<32x128xf32>
    %141 = arith.maximumf %140, %139 : vector<32x128xf32>
    %142 = vector.broadcast %cst_52 : f32 to vector<32x128xf32>
    %143 = arith.minimumf %142, %141 : vector<32x128xf32>
    %144 = arith.fptoui %143 : vector<32x128xf32> to vector<32x128xi8>
    %c6 = arith.constant 6 : index
    %c0_53 = arith.constant 0 : index
    %c0_54 = arith.constant 0 : index
    %145 = vector.load %arg3[%c6, %c0_53, %c0_54] : memref<12x32x128xi8, #tpu.memory_space<vmem>>, vector<1x32x128xi8>
    %146 = vector.shape_cast %145 : vector<1x32x128xi8> to vector<32x128xi8>
    %147 = vector.shape_cast %144 : vector<32x128xi8> to vector<1x32x128xi8>
    tpu.vector_store %arg3[%c6, %c0_53, %c0_54], %147 {strides = array<i32>} : memref<12x32x128xi8, #tpu.memory_space<vmem>>, vector<1x32x128xi8>,
    %148 = math.roundeven %138 : vector<32x128xf32>
    %cst_55 = arith.constant 0.000000e+00 : f32
    %cst_56 = arith.constant 2.550000e+02 : f32
    %149 = vector.broadcast %cst_55 : f32 to vector<32x128xf32>
    %150 = arith.maximumf %149, %148 : vector<32x128xf32>
    %151 = vector.broadcast %cst_56 : f32 to vector<32x128xf32>
    %152 = arith.minimumf %151, %150 : vector<32x128xf32>
    %153 = arith.fptoui %152 : vector<32x128xf32> to vector<32x128xi8>
    %c7 = arith.constant 7 : index
    %c0_57 = arith.constant 0 : index
    %c0_58 = arith.constant 0 : index
    %154 = vector.load %arg3[%c7, %c0_57, %c0_58] : memref<12x32x128xi8, #tpu.memory_space<vmem>>, vector<1x32x128xi8>
    %155 = vector.shape_cast %154 : vector<1x32x128xi8> to vector<32x128xi8>
    %156 = vector.shape_cast %153 : vector<32x128xi8> to vector<1x32x128xi8>
    tpu.vector_store %arg3[%c7, %c0_57, %c0_58], %156 {strides = array<i32>} : memref<12x32x128xi8, #tpu.memory_space<vmem>>, vector<1x32x128xi8>,
    %157 = math.roundeven %87 : vector<32x128xf32>
    %cst_59 = arith.constant 0.000000e+00 : f32
    %cst_60 = arith.constant 2.550000e+02 : f32
    %158 = vector.broadcast %cst_59 : f32 to vector<32x128xf32>
    %159 = arith.maximumf %158, %157 : vector<32x128xf32>
    %160 = vector.broadcast %cst_60 : f32 to vector<32x128xf32>
    %161 = arith.minimumf %160, %159 : vector<32x128xf32>
    %162 = arith.fptoui %161 : vector<32x128xf32> to vector<32x128xi8>
    %c8 = arith.constant 8 : index
    %c0_61 = arith.constant 0 : index
    %c0_62 = arith.constant 0 : index
    %163 = vector.load %arg3[%c8, %c0_61, %c0_62] : memref<12x32x128xi8, #tpu.memory_space<vmem>>, vector<1x32x128xi8>
    %164 = vector.shape_cast %163 : vector<1x32x128xi8> to vector<32x128xi8>
    %165 = vector.shape_cast %162 : vector<32x128xi8> to vector<1x32x128xi8>
    tpu.vector_store %arg3[%c8, %c0_61, %c0_62], %165 {strides = array<i32>} : memref<12x32x128xi8, #tpu.memory_space<vmem>>, vector<1x32x128xi8>,
    %cst_63 = arith.constant 0.00392156886 : f32
    %166 = vector.broadcast %cst_63 : f32 to vector<32x128xf32>
    %167 = arith.mulf %3, %166 : vector<32x128xf32>
    %cst_64 = arith.constant 5.500000e-02 : f32
    %168 = vector.broadcast %cst_64 : f32 to vector<32x128xf32>
    %169 = arith.addf %167, %168 : vector<32x128xf32>
    %cst_65 = arith.constant 0.947867274 : f32
    %170 = vector.broadcast %cst_65 : f32 to vector<32x128xf32>
    %171 = arith.mulf %169, %170 : vector<32x128xf32>
    %172 = arith.mulf %171, %171 : vector<32x128xf32>
    %173 = tpu.bitcast %172 : vector<32x128xf32> -> vector<32x128xi32>
    %174 = arith.sitofp %173 : vector<32x128xi32> to vector<32x128xf32>
    %cst_66 = arith.constant 2.000000e-01 : f32
    %175 = vector.broadcast %cst_66 : f32 to vector<32x128xf32>
    %176 = arith.mulf %174, %175 : vector<32x128xf32>
    %cst_67 = arith.constant 1.27797043E+9 : f32
    %177 = vector.broadcast %cst_67 : f32 to vector<32x128xf32>
    %178 = arith.subf %177, %176 : vector<32x128xf32>
    %179 = arith.fptosi %178 : vector<32x128xf32> to vector<32x128xi32>
    %180 = tpu.bitcast %179 : vector<32x128xi32> -> vector<32x128xf32>
    %181 = arith.mulf %180, %180 : vector<32x128xf32>
    %182 = arith.mulf %172, %181 : vector<32x128xf32>
    %183 = arith.mulf %182, %181 : vector<32x128xf32>
    %184 = arith.mulf %183, %180 : vector<32x128xf32>
    %cst_68 = arith.constant 6.000000e+00 : f32
    %185 = vector.broadcast %cst_68 : f32 to vector<32x128xf32>
    %186 = arith.subf %185, %184 : vector<32x128xf32>
    %187 = arith.mulf %180, %186 : vector<32x128xf32>
    %cst_69 = arith.constant 2.000000e-01 : f32
    %188 = vector.broadcast %cst_69 : f32 to vector<32x128xf32>
    %189 = arith.mulf %187, %188 : vector<32x128xf32>
    %190 = arith.mulf %189, %189 : vector<32x128xf32>
    %191 = arith.mulf %172, %190 : vector<32x128xf32>
    %192 = arith.mulf %191, %190 : vector<32x128xf32>
    %193 = arith.mulf %192, %189 : vector<32x128xf32>
    %cst_70 = arith.constant 6.000000e+00 : f32
    %194 = vector.broadcast %cst_70 : f32 to vector<32x128xf32>
    %195 = arith.subf %194, %193 : vector<32x128xf32>
    %196 = arith.mulf %189, %195 : vector<32x128xf32>
    %cst_71 = arith.constant 2.000000e-01 : f32
    %197 = vector.broadcast %cst_71 : f32 to vector<32x128xf32>
    %198 = arith.mulf %196, %197 : vector<32x128xf32>
    %199 = arith.mulf %198, %198 : vector<32x128xf32>
    %200 = arith.mulf %172, %172 : vector<32x128xf32>
    %201 = arith.mulf %200, %199 : vector<32x128xf32>
    %202 = arith.mulf %201, %199 : vector<32x128xf32>
    %cst_72 = arith.constant 4.045000e-02 : f32
    %203 = vector.broadcast %cst_72 : f32 to vector<32x128xf32>
    %204 = arith.cmpf ole, %167, %203 : vector<32x128xf32>
    %cst_73 = arith.constant 0.0773993805 : f32
    %205 = vector.broadcast %cst_73 : f32 to vector<32x128xf32>
    %206 = arith.mulf %167, %205 : vector<32x128xf32>
    %207 = arith.select %204, %206, %202 : vector<32x128xi1>, vector<32x128xf32>
    %cst_74 = arith.constant 0.00392156886 : f32
    %208 = vector.broadcast %cst_74 : f32 to vector<32x128xf32>
    %209 = arith.mulf %8, %208 : vector<32x128xf32>
    %cst_75 = arith.constant 5.500000e-02 : f32
    %210 = vector.broadcast %cst_75 : f32 to vector<32x128xf32>
    %211 = arith.addf %209, %210 : vector<32x128xf32>
    %cst_76 = arith.constant 0.947867274 : f32
    %212 = vector.broadcast %cst_76 : f32 to vector<32x128xf32>
    %213 = arith.mulf %211, %212 : vector<32x128xf32>
    %214 = arith.mulf %213, %213 : vector<32x128xf32>
    %215 = tpu.bitcast %214 : vector<32x128xf32> -> vector<32x128xi32>
    %216 = arith.sitofp %215 : vector<32x128xi32> to vector<32x128xf32>
    %cst_77 = arith.constant 2.000000e-01 : f32
    %217 = vector.broadcast %cst_77 : f32 to vector<32x128xf32>
    %218 = arith.mulf %216, %217 : vector<32x128xf32>
    %cst_78 = arith.constant 1.27797043E+9 : f32
    %219 = vector.broadcast %cst_78 : f32 to vector<32x128xf32>
    %220 = arith.subf %219, %218 : vector<32x128xf32>
    %221 = arith.fptosi %220 : vector<32x128xf32> to vector<32x128xi32>
    %222 = tpu.bitcast %221 : vector<32x128xi32> -> vector<32x128xf32>
    %223 = arith.mulf %222, %222 : vector<32x128xf32>
    %224 = arith.mulf %214, %223 : vector<32x128xf32>
    %225 = arith.mulf %224, %223 : vector<32x128xf32>
    %226 = arith.mulf %225, %222 : vector<32x128xf32>
    %cst_79 = arith.constant 6.000000e+00 : f32
    %227 = vector.broadcast %cst_79 : f32 to vector<32x128xf32>
    %228 = arith.subf %227, %226 : vector<32x128xf32>
    %229 = arith.mulf %222, %228 : vector<32x128xf32>
    %cst_80 = arith.constant 2.000000e-01 : f32
    %230 = vector.broadcast %cst_80 : f32 to vector<32x128xf32>
    %231 = arith.mulf %229, %230 : vector<32x128xf32>
    %232 = arith.mulf %231, %231 : vector<32x128xf32>
    %233 = arith.mulf %214, %232 : vector<32x128xf32>
    %234 = arith.mulf %233, %232 : vector<32x128xf32>
    %235 = arith.mulf %234, %231 : vector<32x128xf32>
    %cst_81 = arith.constant 6.000000e+00 : f32
    %236 = vector.broadcast %cst_81 : f32 to vector<32x128xf32>
    %237 = arith.subf %236, %235 : vector<32x128xf32>
    %238 = arith.mulf %231, %237 : vector<32x128xf32>
    %cst_82 = arith.constant 2.000000e-01 : f32
    %239 = vector.broadcast %cst_82 : f32 to vector<32x128xf32>
    %240 = arith.mulf %238, %239 : vector<32x128xf32>
    %241 = arith.mulf %240, %240 : vector<32x128xf32>
    %242 = arith.mulf %214, %214 : vector<32x128xf32>
    %243 = arith.mulf %242, %241 : vector<32x128xf32>
    %244 = arith.mulf %243, %241 : vector<32x128xf32>
    %cst_83 = arith.constant 4.045000e-02 : f32
    %245 = vector.broadcast %cst_83 : f32 to vector<32x128xf32>
    %246 = arith.cmpf ole, %209, %245 : vector<32x128xf32>
    %cst_84 = arith.constant 0.0773993805 : f32
    %247 = vector.broadcast %cst_84 : f32 to vector<32x128xf32>
    %248 = arith.mulf %209, %247 : vector<32x128xf32>
    %249 = arith.select %246, %248, %244 : vector<32x128xi1>, vector<32x128xf32>
    %cst_85 = arith.constant 0.00392156886 : f32
    %250 = vector.broadcast %cst_85 : f32 to vector<32x128xf32>
    %251 = arith.mulf %13, %250 : vector<32x128xf32>
    %cst_86 = arith.constant 5.500000e-02 : f32
    %252 = vector.broadcast %cst_86 : f32 to vector<32x128xf32>
    %253 = arith.addf %251, %252 : vector<32x128xf32>
    %cst_87 = arith.constant 0.947867274 : f32
    %254 = vector.broadcast %cst_87 : f32 to vector<32x128xf32>
    %255 = arith.mulf %253, %254 : vector<32x128xf32>
    %256 = arith.mulf %255, %255 : vector<32x128xf32>
    %257 = tpu.bitcast %256 : vector<32x128xf32> -> vector<32x128xi32>
    %258 = arith.sitofp %257 : vector<32x128xi32> to vector<32x128xf32>
    %cst_88 = arith.constant 2.000000e-01 : f32
    %259 = vector.broadcast %cst_88 : f32 to vector<32x128xf32>
    %260 = arith.mulf %258, %259 : vector<32x128xf32>
    %cst_89 = arith.constant 1.27797043E+9 : f32
    %261 = vector.broadcast %cst_89 : f32 to vector<32x128xf32>
    %262 = arith.subf %261, %260 : vector<32x128xf32>
    %263 = arith.fptosi %262 : vector<32x128xf32> to vector<32x128xi32>
    %264 = tpu.bitcast %263 : vector<32x128xi32> -> vector<32x128xf32>
    %265 = arith.mulf %264, %264 : vector<32x128xf32>
    %266 = arith.mulf %256, %265 : vector<32x128xf32>
    %267 = arith.mulf %266, %265 : vector<32x128xf32>
    %268 = arith.mulf %267, %264 : vector<32x128xf32>
    %cst_90 = arith.constant 6.000000e+00 : f32
    %269 = vector.broadcast %cst_90 : f32 to vector<32x128xf32>
    %270 = arith.subf %269, %268 : vector<32x128xf32>
    %271 = arith.mulf %264, %270 : vector<32x128xf32>
    %cst_91 = arith.constant 2.000000e-01 : f32
    %272 = vector.broadcast %cst_91 : f32 to vector<32x128xf32>
    %273 = arith.mulf %271, %272 : vector<32x128xf32>
    %274 = arith.mulf %273, %273 : vector<32x128xf32>
    %275 = arith.mulf %256, %274 : vector<32x128xf32>
    %276 = arith.mulf %275, %274 : vector<32x128xf32>
    %277 = arith.mulf %276, %273 : vector<32x128xf32>
    %cst_92 = arith.constant 6.000000e+00 : f32
    %278 = vector.broadcast %cst_92 : f32 to vector<32x128xf32>
    %279 = arith.subf %278, %277 : vector<32x128xf32>
    %280 = arith.mulf %273, %279 : vector<32x128xf32>
    %cst_93 = arith.constant 2.000000e-01 : f32
    %281 = vector.broadcast %cst_93 : f32 to vector<32x128xf32>
    %282 = arith.mulf %280, %281 : vector<32x128xf32>
    %283 = arith.mulf %282, %282 : vector<32x128xf32>
    %284 = arith.mulf %256, %256 : vector<32x128xf32>
    %285 = arith.mulf %284, %283 : vector<32x128xf32>
    %286 = arith.mulf %285, %283 : vector<32x128xf32>
    %cst_94 = arith.constant 4.045000e-02 : f32
    %287 = vector.broadcast %cst_94 : f32 to vector<32x128xf32>
    %288 = arith.cmpf ole, %251, %287 : vector<32x128xf32>
    %cst_95 = arith.constant 0.0773993805 : f32
    %289 = vector.broadcast %cst_95 : f32 to vector<32x128xf32>
    %290 = arith.mulf %251, %289 : vector<32x128xf32>
    %291 = arith.select %288, %290, %286 : vector<32x128xi1>, vector<32x128xf32>
    %cst_96 = arith.constant 0.433952749 : f32
    %292 = vector.broadcast %cst_96 : f32 to vector<32x128xf32>
    %293 = arith.mulf %292, %207 : vector<32x128xf32>
    %cst_97 = arith.constant 0.376219422 : f32
    %294 = vector.broadcast %cst_97 : f32 to vector<32x128xf32>
    %295 = arith.mulf %294, %249 : vector<32x128xf32>
    %296 = arith.addf %293, %295 : vector<32x128xf32>
    %cst_98 = arith.constant 0.18982783 : f32
    %297 = vector.broadcast %cst_98 : f32 to vector<32x128xf32>
    %298 = arith.mulf %297, %291 : vector<32x128xf32>
    %299 = arith.addf %296, %298 : vector<32x128xf32>
    %cst_99 = arith.constant 2.126710e-01 : f32
    %300 = vector.broadcast %cst_99 : f32 to vector<32x128xf32>
    %301 = arith.mulf %300, %207 : vector<32x128xf32>
    %cst_100 = arith.constant 7.151600e-01 : f32
    %302 = vector.broadcast %cst_100 : f32 to vector<32x128xf32>
    %303 = arith.mulf %302, %249 : vector<32x128xf32>
    %304 = arith.addf %301, %303 : vector<32x128xf32>
    %cst_101 = arith.constant 7.216900e-02 : f32
    %305 = vector.broadcast %cst_101 : f32 to vector<32x128xf32>
    %306 = arith.mulf %305, %291 : vector<32x128xf32>
    %307 = arith.addf %304, %306 : vector<32x128xf32>
    %cst_102 = arith.constant 0.017757915 : f32
    %308 = vector.broadcast %cst_102 : f32 to vector<32x128xf32>
    %309 = arith.mulf %308, %207 : vector<32x128xf32>
    %cst_103 = arith.constant 0.109476522 : f32
    %310 = vector.broadcast %cst_103 : f32 to vector<32x128xf32>
    %311 = arith.mulf %310, %249 : vector<32x128xf32>
    %312 = arith.addf %309, %311 : vector<32x128xf32>
    %cst_104 = arith.constant 0.872765541 : f32
    %313 = vector.broadcast %cst_104 : f32 to vector<32x128xf32>
    %314 = arith.mulf %313, %291 : vector<32x128xf32>
    %315 = arith.addf %312, %314 : vector<32x128xf32>
    %cst_105 = arith.constant 8.856000e-03 : f32
    %316 = vector.broadcast %cst_105 : f32 to vector<32x128xf32>
    %317 = arith.maximumf %299, %316 : vector<32x128xf32>
    %318 = tpu.bitcast %317 : vector<32x128xf32> -> vector<32x128xi32>
    %319 = arith.sitofp %318 : vector<32x128xi32> to vector<32x128xf32>
    %cst_106 = arith.constant 0.333333343 : f32
    %320 = vector.broadcast %cst_106 : f32 to vector<32x128xf32>
    %321 = arith.mulf %319, %320 : vector<32x128xf32>
    %cst_107 = arith.constant 1.4199671E+9 : f32
    %322 = vector.broadcast %cst_107 : f32 to vector<32x128xf32>
    %323 = arith.subf %322, %321 : vector<32x128xf32>
    %324 = arith.fptosi %323 : vector<32x128xf32> to vector<32x128xi32>
    %325 = tpu.bitcast %324 : vector<32x128xi32> -> vector<32x128xf32>
    %326 = arith.mulf %317, %325 : vector<32x128xf32>
    %327 = arith.mulf %326, %325 : vector<32x128xf32>
    %328 = arith.mulf %327, %325 : vector<32x128xf32>
    %cst_108 = arith.constant 4.000000e+00 : f32
    %329 = vector.broadcast %cst_108 : f32 to vector<32x128xf32>
    %330 = arith.subf %329, %328 : vector<32x128xf32>
    %331 = arith.mulf %325, %330 : vector<32x128xf32>
    %cst_109 = arith.constant 0.333333343 : f32
    %332 = vector.broadcast %cst_109 : f32 to vector<32x128xf32>
    %333 = arith.mulf %331, %332 : vector<32x128xf32>
    %334 = arith.mulf %317, %333 : vector<32x128xf32>
    %335 = arith.mulf %334, %333 : vector<32x128xf32>
    %336 = arith.mulf %335, %333 : vector<32x128xf32>
    %cst_110 = arith.constant 4.000000e+00 : f32
    %337 = vector.broadcast %cst_110 : f32 to vector<32x128xf32>
    %338 = arith.subf %337, %336 : vector<32x128xf32>
    %339 = arith.mulf %333, %338 : vector<32x128xf32>
    %cst_111 = arith.constant 0.333333343 : f32
    %340 = vector.broadcast %cst_111 : f32 to vector<32x128xf32>
    %341 = arith.mulf %339, %340 : vector<32x128xf32>
    %342 = arith.mulf %317, %341 : vector<32x128xf32>
    %343 = arith.mulf %342, %341 : vector<32x128xf32>
    %cst_112 = arith.constant 8.856000e-03 : f32
    %344 = vector.broadcast %cst_112 : f32 to vector<32x128xf32>
    %345 = arith.cmpf ogt, %299, %344 : vector<32x128xf32>
    %cst_113 = arith.constant 7.787000e+00 : f32
    %346 = vector.broadcast %cst_113 : f32 to vector<32x128xf32>
    %347 = arith.mulf %346, %299 : vector<32x128xf32>
    %cst_114 = arith.constant 0.137931034 : f32
    %348 = vector.broadcast %cst_114 : f32 to vector<32x128xf32>
    %349 = arith.addf %347, %348 : vector<32x128xf32>
    %350 = arith.select %345, %343, %349 : vector<32x128xi1>, vector<32x128xf32>
    %cst_115 = arith.constant 8.856000e-03 : f32
    %351 = vector.broadcast %cst_115 : f32 to vector<32x128xf32>
    %352 = arith.maximumf %307, %351 : vector<32x128xf32>
    %353 = tpu.bitcast %352 : vector<32x128xf32> -> vector<32x128xi32>
    %354 = arith.sitofp %353 : vector<32x128xi32> to vector<32x128xf32>
    %cst_116 = arith.constant 0.333333343 : f32
    %355 = vector.broadcast %cst_116 : f32 to vector<32x128xf32>
    %356 = arith.mulf %354, %355 : vector<32x128xf32>
    %cst_117 = arith.constant 1.4199671E+9 : f32
    %357 = vector.broadcast %cst_117 : f32 to vector<32x128xf32>
    %358 = arith.subf %357, %356 : vector<32x128xf32>
    %359 = arith.fptosi %358 : vector<32x128xf32> to vector<32x128xi32>
    %360 = tpu.bitcast %359 : vector<32x128xi32> -> vector<32x128xf32>
    %361 = arith.mulf %352, %360 : vector<32x128xf32>
    %362 = arith.mulf %361, %360 : vector<32x128xf32>
    %363 = arith.mulf %362, %360 : vector<32x128xf32>
    %cst_118 = arith.constant 4.000000e+00 : f32
    %364 = vector.broadcast %cst_118 : f32 to vector<32x128xf32>
    %365 = arith.subf %364, %363 : vector<32x128xf32>
    %366 = arith.mulf %360, %365 : vector<32x128xf32>
    %cst_119 = arith.constant 0.333333343 : f32
    %367 = vector.broadcast %cst_119 : f32 to vector<32x128xf32>
    %368 = arith.mulf %366, %367 : vector<32x128xf32>
    %369 = arith.mulf %352, %368 : vector<32x128xf32>
    %370 = arith.mulf %369, %368 : vector<32x128xf32>
    %371 = arith.mulf %370, %368 : vector<32x128xf32>
    %cst_120 = arith.constant 4.000000e+00 : f32
    %372 = vector.broadcast %cst_120 : f32 to vector<32x128xf32>
    %373 = arith.subf %372, %371 : vector<32x128xf32>
    %374 = arith.mulf %368, %373 : vector<32x128xf32>
    %cst_121 = arith.constant 0.333333343 : f32
    %375 = vector.broadcast %cst_121 : f32 to vector<32x128xf32>
    %376 = arith.mulf %374, %375 : vector<32x128xf32>
    %377 = arith.mulf %352, %376 : vector<32x128xf32>
    %378 = arith.mulf %377, %376 : vector<32x128xf32>
    %cst_122 = arith.constant 8.856000e-03 : f32
    %379 = vector.broadcast %cst_122 : f32 to vector<32x128xf32>
    %380 = arith.cmpf ogt, %307, %379 : vector<32x128xf32>
    %cst_123 = arith.constant 7.787000e+00 : f32
    %381 = vector.broadcast %cst_123 : f32 to vector<32x128xf32>
    %382 = arith.mulf %381, %307 : vector<32x128xf32>
    %cst_124 = arith.constant 0.137931034 : f32
    %383 = vector.broadcast %cst_124 : f32 to vector<32x128xf32>
    %384 = arith.addf %382, %383 : vector<32x128xf32>
    %385 = arith.select %380, %378, %384 : vector<32x128xi1>, vector<32x128xf32>
    %cst_125 = arith.constant 8.856000e-03 : f32
    %386 = vector.broadcast %cst_125 : f32 to vector<32x128xf32>
    %387 = arith.maximumf %315, %386 : vector<32x128xf32>
    %388 = tpu.bitcast %387 : vector<32x128xf32> -> vector<32x128xi32>
    %389 = arith.sitofp %388 : vector<32x128xi32> to vector<32x128xf32>
    %cst_126 = arith.constant 0.333333343 : f32
    %390 = vector.broadcast %cst_126 : f32 to vector<32x128xf32>
    %391 = arith.mulf %389, %390 : vector<32x128xf32>
    %cst_127 = arith.constant 1.4199671E+9 : f32
    %392 = vector.broadcast %cst_127 : f32 to vector<32x128xf32>
    %393 = arith.subf %392, %391 : vector<32x128xf32>
    %394 = arith.fptosi %393 : vector<32x128xf32> to vector<32x128xi32>
    %395 = tpu.bitcast %394 : vector<32x128xi32> -> vector<32x128xf32>
    %396 = arith.mulf %387, %395 : vector<32x128xf32>
    %397 = arith.mulf %396, %395 : vector<32x128xf32>
    %398 = arith.mulf %397, %395 : vector<32x128xf32>
    %cst_128 = arith.constant 4.000000e+00 : f32
    %399 = vector.broadcast %cst_128 : f32 to vector<32x128xf32>
    %400 = arith.subf %399, %398 : vector<32x128xf32>
    %401 = arith.mulf %395, %400 : vector<32x128xf32>
    %cst_129 = arith.constant 0.333333343 : f32
    %402 = vector.broadcast %cst_129 : f32 to vector<32x128xf32>
    %403 = arith.mulf %401, %402 : vector<32x128xf32>
    %404 = arith.mulf %387, %403 : vector<32x128xf32>
    %405 = arith.mulf %404, %403 : vector<32x128xf32>
    %406 = arith.mulf %405, %403 : vector<32x128xf32>
    %cst_130 = arith.constant 4.000000e+00 : f32
    %407 = vector.broadcast %cst_130 : f32 to vector<32x128xf32>
    %408 = arith.subf %407, %406 : vector<32x128xf32>
    %409 = arith.mulf %403, %408 : vector<32x128xf32>
    %cst_131 = arith.constant 0.333333343 : f32
    %410 = vector.broadcast %cst_131 : f32 to vector<32x128xf32>
    %411 = arith.mulf %409, %410 : vector<32x128xf32>
    %412 = arith.mulf %387, %411 : vector<32x128xf32>
    %413 = arith.mulf %412, %411 : vector<32x128xf32>
    %cst_132 = arith.constant 8.856000e-03 : f32
    %414 = vector.broadcast %cst_132 : f32 to vector<32x128xf32>
    %415 = arith.cmpf ogt, %315, %414 : vector<32x128xf32>
    %cst_133 = arith.constant 7.787000e+00 : f32
    %416 = vector.broadcast %cst_133 : f32 to vector<32x128xf32>
    %417 = arith.mulf %416, %315 : vector<32x128xf32>
    %cst_134 = arith.constant 0.137931034 : f32
    %418 = vector.broadcast %cst_134 : f32 to vector<32x128xf32>
    %419 = arith.addf %417, %418 : vector<32x128xf32>
    %420 = arith.select %415, %413, %419 : vector<32x128xi1>, vector<32x128xf32>
    %cst_135 = arith.constant 8.856000e-03 : f32
    %421 = vector.broadcast %cst_135 : f32 to vector<32x128xf32>
    %422 = arith.cmpf ogt, %307, %421 : vector<32x128xf32>
    %cst_136 = arith.constant 1.160000e+02 : f32
    %423 = vector.broadcast %cst_136 : f32 to vector<32x128xf32>
    %424 = arith.mulf %423, %385 : vector<32x128xf32>
    %cst_137 = arith.constant 1.600000e+01 : f32
    %425 = vector.broadcast %cst_137 : f32 to vector<32x128xf32>
    %426 = arith.subf %424, %425 : vector<32x128xf32>
    %cst_138 = arith.constant 903.299987 : f32
    %427 = vector.broadcast %cst_138 : f32 to vector<32x128xf32>
    %428 = arith.mulf %427, %307 : vector<32x128xf32>
    %429 = arith.select %422, %426, %428 : vector<32x128xi1>, vector<32x128xf32>
    %cst_139 = arith.constant 2.550000e+00 : f32
    %430 = vector.broadcast %cst_139 : f32 to vector<32x128xf32>
    %431 = arith.mulf %429, %430 : vector<32x128xf32>
    %432 = math.roundeven %431 : vector<32x128xf32>
    %cst_140 = arith.constant 0.000000e+00 : f32
    %cst_141 = arith.constant 2.550000e+02 : f32
    %433 = vector.broadcast %cst_140 : f32 to vector<32x128xf32>
    %434 = arith.maximumf %433, %432 : vector<32x128xf32>
    %435 = vector.broadcast %cst_141 : f32 to vector<32x128xf32>
    %436 = arith.minimumf %435, %434 : vector<32x128xf32>
    %437 = arith.fptoui %436 : vector<32x128xf32> to vector<32x128xi8>
    %c9 = arith.constant 9 : index
    %c0_142 = arith.constant 0 : index
    %c0_143 = arith.constant 0 : index
    %438 = vector.load %arg3[%c9, %c0_142, %c0_143] : memref<12x32x128xi8, #tpu.memory_space<vmem>>, vector<1x32x128xi8>
    %439 = vector.shape_cast %438 : vector<1x32x128xi8> to vector<32x128xi8>
    %440 = vector.shape_cast %437 : vector<32x128xi8> to vector<1x32x128xi8>
    tpu.vector_store %arg3[%c9, %c0_142, %c0_143], %440 {strides = array<i32>} : memref<12x32x128xi8, #tpu.memory_space<vmem>>, vector<1x32x128xi8>,
    %441 = arith.subf %350, %385 : vector<32x128xf32>
    %cst_144 = arith.constant 5.000000e+02 : f32
    %442 = vector.broadcast %cst_144 : f32 to vector<32x128xf32>
    %443 = arith.mulf %442, %441 : vector<32x128xf32>
    %cst_145 = arith.constant 1.280000e+02 : f32
    %444 = vector.broadcast %cst_145 : f32 to vector<32x128xf32>
    %445 = arith.addf %443, %444 : vector<32x128xf32>
    %446 = math.roundeven %445 : vector<32x128xf32>
    %cst_146 = arith.constant 0.000000e+00 : f32
    %cst_147 = arith.constant 2.550000e+02 : f32
    %447 = vector.broadcast %cst_146 : f32 to vector<32x128xf32>
    %448 = arith.maximumf %447, %446 : vector<32x128xf32>
    %449 = vector.broadcast %cst_147 : f32 to vector<32x128xf32>
    %450 = arith.minimumf %449, %448 : vector<32x128xf32>
    %451 = arith.fptoui %450 : vector<32x128xf32> to vector<32x128xi8>
    %c10 = arith.constant 10 : index
    %c0_148 = arith.constant 0 : index
    %c0_149 = arith.constant 0 : index
    %452 = vector.load %arg3[%c10, %c0_148, %c0_149] : memref<12x32x128xi8, #tpu.memory_space<vmem>>, vector<1x32x128xi8>
    %453 = vector.shape_cast %452 : vector<1x32x128xi8> to vector<32x128xi8>
    %454 = vector.shape_cast %451 : vector<32x128xi8> to vector<1x32x128xi8>
    tpu.vector_store %arg3[%c10, %c0_148, %c0_149], %454 {strides = array<i32>} : memref<12x32x128xi8, #tpu.memory_space<vmem>>, vector<1x32x128xi8>,
    %455 = arith.subf %385, %420 : vector<32x128xf32>
    %cst_150 = arith.constant 2.000000e+02 : f32
    %456 = vector.broadcast %cst_150 : f32 to vector<32x128xf32>
    %457 = arith.mulf %456, %455 : vector<32x128xf32>
    %cst_151 = arith.constant 1.280000e+02 : f32
    %458 = vector.broadcast %cst_151 : f32 to vector<32x128xf32>
    %459 = arith.addf %457, %458 : vector<32x128xf32>
    %460 = math.roundeven %459 : vector<32x128xf32>
    %cst_152 = arith.constant 0.000000e+00 : f32
    %cst_153 = arith.constant 2.550000e+02 : f32
    %461 = vector.broadcast %cst_152 : f32 to vector<32x128xf32>
    %462 = arith.maximumf %461, %460 : vector<32x128xf32>
    %463 = vector.broadcast %cst_153 : f32 to vector<32x128xf32>
    %464 = arith.minimumf %463, %462 : vector<32x128xf32>
    %465 = arith.fptoui %464 : vector<32x128xf32> to vector<32x128xi8>
    %c11 = arith.constant 11 : index
    %c0_154 = arith.constant 0 : index
    %c0_155 = arith.constant 0 : index
    %466 = vector.load %arg3[%c11, %c0_154, %c0_155] : memref<12x32x128xi8, #tpu.memory_space<vmem>>, vector<1x32x128xi8>
    %467 = vector.shape_cast %466 : vector<1x32x128xi8> to vector<32x128xi8>
    %468 = vector.shape_cast %465 : vector<32x128xi8> to vector<1x32x128xi8>
    tpu.vector_store %arg3[%c11, %c0_154, %c0_155], %468 {strides = array<i32>} : memref<12x32x128xi8, #tpu.memory_space<vmem>>, vector<1x32x128xi8>,
    return
  }
  func.func @transform_0(%arg0: i32, %arg1: i32) -> (i32, i32) {
    %c0_i32 = arith.constant 0 : i32
    return %arg0, %arg1 : i32, i32
  }
  func.func @transform_1(%arg0: i32, %arg1: i32) -> (i32, i32, i32) {
    %c0_i32 = arith.constant 0 : i32
    %c0_i32_0 = arith.constant 0 : i32
    return %c0_i32, %arg0, %arg1 : i32, i32, i32
  }
}

</mosaic_0001>

<llo_original>
// kernel: tpu_custom_call.1
$region0: #{tpu_custom_call.1}
  #allocation0 [shape = 'u32[]', space=smem, size = 0x4, offset = 0x4, fixed_abs, tag = 'smem constant byte address 0x4 - core index']
  #allocation1 [shape = 'u32[144,128]{1,0:T(1,128)}', space=vmem, size = 0x12000, scoped, tag = 'internal scratch']
  %s0 = inlined_call_operand.hbm [shape: s32[96,256], index: 0, kind: input, shape index: {}]
  %s1 = inlined_call_operand.hbm [shape: u8[12,96,256], index: 1, kind: output, shape index: {}]
  %s2 = sld [smem:[#allocation0]]
  $region41: #{tpu_custom_call.1} parent=0
    _
  %s4 = ssub.s32 1, %s2
  %s5 = scalar_select 0, %s4, %s2
  $region1: #{tpu_custom_call.1} parent=0
    #allocation2 [shape = 'u8[32768]{0}', space=vmem, size = 0x8000, scoped, tag = 'input window, operand 0']
    #allocation3 [shape = 's32[2]{0}', space=sflag, size = 0x8, scoped, tag = 'scoped memory for tpu_custom_call.1']
    #allocation4 [shape = 's32[2]{0}', space=sflag, size = 0x8, scoped, tag = 'scoped memory for tpu_custom_call.1']
    #allocation5 [shape = 'u8[98304]{0}', space=vmem, size = 0x18000, scoped, tag = 'output window, operand 0']
    %6 = vsyncpa [#allocation3], 0
    %s7 = scalar_lea.sflag [#allocation3], 1
    %8 = vsyncpa %s7, 0
    %9 = vsyncpa [#allocation4], 0
    %s10 = scalar_lea.sflag [#allocation4], 1
    %11 = vsyncpa %s10, 0
    loop: start=0, step=1, limit=8
    $region2: #{tpu_custom_call.1} parent=1 // loop_pre_header
      _
    $region3: #{tpu_custom_call.1} parent=1 // loop_header
      %s13 = sphi 0, %s17
      %p14 = scmp.ge.s32.totalorder %s13, 8
      %s20 = sphi 0, %s32
      %s21 = sphi 0, %s28
      %s22 = sphi 0, %s20
      %s23 = sphi 0, %s21
      %s24 = sphi 0, %s22
      %s25 = sphi 0, %s23
      %s37 = sphi 0, %s39
      %s40 = sphi 0, %s37
      %s41 = sphi 0, %s40
      %s57 = sphi 0, %s41
      %s65 = sphi 0, %s67
      %s68 = sphi 0, %s65
      %s69 = sphi 0, %s68
      %s85 = sphi 0, %s69
    $region4: #{tpu_custom_call.1} parent=1 // loop_header_branch
      %16 = sbr.rel (%p14) target = $region8
    $region5: #{tpu_custom_call.1} parent=1 // loop_body
      %s18 = ssub.s32 %s13, 1
      %s19 = ssub.s32 %s13, 2
      %s26 = sadd.s32 1, %s21
      %p27 = scmp.ge.s32.totalorder %s26, 2
      %s28 = scalar_select %p27, 0, %s26
      %s29 = sadd.s32 1, %s20
      %s30 = scalar_select %p27, %s29, %s20
      %p31 = scmp.ge.s32.totalorder %s30, 3
      %s32 = scalar_select %p31, 0, %s30
      %s33 = ssub.s32 %s20, %s32
      %s34 = ssub.s32 %s21, %s28
      %s35 = sor.u32 %s33, %s34
      %p36 = scmp.eq.s32.totalorder %s35, 0
      %s38 = sadd.s32 %s37, 1
      %s39 = scalar_select %p36, %s37, %s38
      %p42 = pneg %p36
      %p43 = scmp.eq.s32.totalorder %s13, 5
      %p44 = por %p42, %p43
      %p45 = scmp.ne.s32.totalorder %s37, %s40
      %p46 = scmp.eq.s32.totalorder %s13, 0
      %p47 = por %p45, %p46
      %p48 = scmp.ne.s32.totalorder %s37, %s40
      %p49 = scmp.eq.s32.totalorder %s18, 5
      %p50 = por %p48, %p49
      %p51 = scmp.ne.s32.totalorder %s40, %s41
      %p52 = scmp.eq.s32.totalorder %s18, 0
      %p53 = por %p51, %p52
      %p54 = scmp.ne.s32.totalorder %s40, %s41
      %p55 = scmp.eq.s32.totalorder %s19, 5
      %p56 = por %p54, %p55
      %p58 = scmp.ne.s32.totalorder %s41, %s57
      %p59 = scmp.eq.s32.totalorder %s19, 0
      %p60 = por %p58, %p59
      %s61 = ssub.s32 %s20, %s32
      %s62 = ssub.s32 %s21, %s28
      %s63 = sor.u32 %s61, %s62
      %p64 = scmp.eq.s32.totalorder %s63, 0
      %s66 = sadd.s32 %s65, 1
      %s67 = scalar_select %p64, %s65, %s66
      %p70 = pneg %p64
      %p71 = scmp.eq.s32.totalorder %s13, 5
      %p72 = por %p70, %p71
      %p73 = scmp.ne.s32.totalorder %s65, %s68
      %p74 = scmp.eq.s32.totalorder %s13, 0
      %p75 = por %p73, %p74
      %p76 = scmp.ne.s32.totalorder %s65, %s68
      %p77 = scmp.eq.s32.totalorder %s18, 5
      %p78 = por %p76, %p77
      %p79 = scmp.ne.s32.totalorder %s68, %s69
      %p80 = scmp.eq.s32.totalorder %s18, 0
      %p81 = por %p79, %p80
      %p82 = scmp.ne.s32.totalorder %s68, %s69
      %p83 = scmp.eq.s32.totalorder %s19, 5
      %p84 = por %p82, %p83
      %p86 = scmp.ne.s32.totalorder %s69, %s85
      %p87 = scmp.eq.s32.totalorder %s19, 0
      %p88 = por %p86, %p87
      %p89 = scmp.le.s32.totalorder 1, %s13
      %p90 = scmp.lt.s32.totalorder %s13, 7
      %p91 = pnand %p89, %p90
      %p92 = pneg %p91
      // Predicated region
      $region9: #{tpu_custom_call.1} parent=5 // pred_check
        _
      $region10: #{tpu_custom_call.1} parent=5 // pred_check_branch
        %94 = sbr.rel (%p91) target = $region12
      $region11: #{tpu_custom_call.1} parent=5 // pred_region
        %s95 = ssub.s32 %s13, 1
      $region12: #{tpu_custom_call.1} parent=5 // pred_fallthru
        _
      %p96 = scmp.lt.s32.totalorder %s13, 6
      // Predicated region
      $region13: #{tpu_custom_call.1} parent=5 // pred_check
        %p97 = pneg %p96
      $region14: #{tpu_custom_call.1} parent=5 // pred_check_branch
        %99 = sbr.rel (%p97) target = $region16
      $region15: #{tpu_custom_call.1} parent=5 // pred_region
        // Predicated region
        $region17: #{tpu_custom_call.1} parent=15 // pred_check
          %p100 = pneg %p47
        $region18: #{tpu_custom_call.1} parent=15 // pred_check_branch
          %102 = sbr.rel (%p100) target = $region20
        $region19: #{tpu_custom_call.1} parent=15 // pred_region
          %s103 = sand.u32 %s37, 1
          %s104 = scalar_lea.sflag [#allocation3], %s103
          %s105 = sand.u32 %s37, 1
          %s106 = smul.addr %s105, 32
          %s107 = scalar_lea.vmem [#allocation2], %s106
          %s108 = smul.u32 4, %s20
          %s110 = ssub.s32 512, 512
          %111 = vsyncadd %s104, %s110
          %s112 = smul.addr %s108, 2
          %s113 = sadd.s32 %s21, %s112
          %s114 = smul.addr %s113, 128
          %s115 = scalar_lea.hbm %s0, %s114
          %s116 = sshll.u32 %s107, 4
          %s117 = int_to_ptr.vmem [resolvable:$true] %s116
          %122 = dma.hbm_to_vmem [thread:$0]  %s115, 512, %s117, %s104, 256, 128, 8
        $region20: #{tpu_custom_call.1} parent=15 // pred_fallthru
          _
      $region16: #{tpu_custom_call.1} parent=5 // pred_fallthru
        _
      %p123 = scmp.le.s32.totalorder 1, %s13
      %p124 = scmp.lt.s32.totalorder %s13, 7
      %p125 = pnand %p123, %p124
      %p126 = pneg %p125
      // Predicated region
      $region21: #{tpu_custom_call.1} parent=5 // pred_check
        _
      $region22: #{tpu_custom_call.1} parent=5 // pred_check_branch
        %128 = sbr.rel (%p125) target = $region24
      $region23: #{tpu_custom_call.1} parent=5 // pred_region
        %s129 = ssub.s32 %s13, 1
        %s130 = sand.u32 %s40, 1
        %s131 = scalar_lea.sflag [#allocation3], %s130
        %s132 = sand.u32 %s40, 1
        %s133 = smul.addr %s132, 32
        %s134 = scalar_lea.vmem [#allocation2], %s133
        // Predicated region
        $region25: #{tpu_custom_call.1} parent=23 // pred_check
          %p135 = pneg %p53
        $region26: #{tpu_custom_call.1} parent=23 // pred_check_branch
          %137 = sbr.rel (%p135) target = $region28
        $region27: #{tpu_custom_call.1} parent=23 // pred_region
          %138 = dma.done %s131, 512
        $region28: #{tpu_custom_call.1} parent=23 // pred_fallthru
          _
        %s139 = sand.u32 %s40, 1
        %s140 = scalar_lea.sflag [#allocation3], %s139
        %s141 = sand.u32 %s40, 1
        %s142 = smul.addr %s141, 32
        %s143 = scalar_lea.vmem [#allocation2], %s142
        %p144 = pneg %p53
        %p145 = pneg %p50
        %p146 = pneg %p81
        %p147 = pneg %p78
        %s148 = sand.u32 %s68, 1
        %s149 = scalar_lea.sflag [#allocation4], %s148
        %s150 = sand.u32 %s68, 1
        %s151 = smul.addr %s150, 96
        %s152 = scalar_lea.vmem [#allocation5], %s151
        %s153 = smul.u32 4, %s22
        %v154 = vld [vmem:[%s134] sm:$0xff]
        %v155 = vld [vmem:[%s134 + $0x8] sm:$0xff]
        %v156 = vld [vmem:[%s134 + $0x10] sm:$0xff]
        %v157 = vld [vmem:[%s134 + $0x18] sm:$0xff]
        %v158 = vand.u32 %v154, 255
        %v159 = vand.u32 %v155, 255
        %v160 = vand.u32 %v156, 255
        %v161 = vand.u32 %v157, 255
        %v162 = vcvt.s32.f32 %v158
        %v163 = vcvt.s32.f32 %v159
        %v164 = vcvt.s32.f32 %v160
        %v165 = vcvt.s32.f32 %v161
        %v166 = vshra.s32 %v154, 8
        %v167 = vshra.s32 %v155, 8
        %v168 = vshra.s32 %v156, 8
        %v169 = vshra.s32 %v157, 8
        %v170 = vand.u32 %v166, 255
        %v171 = vand.u32 %v167, 255
        %v172 = vand.u32 %v168, 255
        %v173 = vand.u32 %v169, 255
        %v174 = vcvt.s32.f32 %v170
        %v175 = vcvt.s32.f32 %v171
        %v176 = vcvt.s32.f32 %v172
        %v177 = vcvt.s32.f32 %v173
        %v178 = vshra.s32 %v154, 16
        %v179 = vshra.s32 %v155, 16
        %v180 = vshra.s32 %v156, 16
        %v181 = vshra.s32 %v157, 16
        %v182 = vand.u32 %v178, 255
        %v183 = vand.u32 %v179, 255
        %v184 = vand.u32 %v180, 255
        %v185 = vand.u32 %v181, 255
        %v186 = vcvt.s32.f32 %v182
        %v187 = vcvt.s32.f32 %v183
        %v188 = vcvt.s32.f32 %v184
        %v189 = vcvt.s32.f32 %v185
        %v190 = vround.ne.pseudo %v162
        %v191 = vround.ne.pseudo %v163
        %v192 = vround.ne.pseudo %v164
        %v193 = vround.ne.pseudo %v165
        %v194 = vmax.f32 %v190, 0.0
        %v195 = vmax.f32 %v191, 0.0
        %v196 = vmax.f32 %v192, 0.0
        %v197 = vmax.f32 %v193, 0.0
        %v198 = vmin.f32 %v194, 255.0
        %v199 = vmin.f32 %v195, 255.0
        %v200 = vmin.f32 %v196, 255.0
        %v201 = vmin.f32 %v197, 255.0
        %v202 = vmax.f32 %v198, 0.0
        %v203 = vmax.f32 %v199, 0.0
        %v204 = vmax.f32 %v200, 0.0
        %v205 = vmax.f32 %v201, 0.0
        %v206 = vmin.f32 %v202, 255.0
        %v207 = vmin.f32 %v203, 255.0
        %v208 = vmin.f32 %v204, 255.0
        %v209 = vmin.f32 %v205, 255.0
        %v210 = vcvt.f32.s32.to.zero.pseudo %v206
        %v211 = vcvt.f32.s32.to.zero.pseudo %v207
        %v212 = vcvt.f32.s32.to.zero.pseudo %v208
        %v213 = vcvt.f32.s32.to.zero.pseudo %v209
        %v214 = vpack.c.b16 %v211, %v210
        %v215 = vpack.c.b16 %v213, %v212
        %v216 = vpack.c.b8 %v215, %v214
        %217 = vst [vmem:[%s152] sm:$0xff] %v216
        %v218 = vround.ne.pseudo %v174
        %v219 = vround.ne.pseudo %v175
        %v220 = vround.ne.pseudo %v176
        %v221 = vround.ne.pseudo %v177
        %v222 = vmax.f32 %v218, 0.0
        %v223 = vmax.f32 %v219, 0.0
        %v224 = vmax.f32 %v220, 0.0
        %v225 = vmax.f32 %v221, 0.0
        %v226 = vmin.f32 %v222, 255.0
        %v227 = vmin.f32 %v223, 255.0
        %v228 = vmin.f32 %v224, 255.0
        %v229 = vmin.f32 %v225, 255.0
        %v230 = vmax.f32 %v226, 0.0
        %v231 = vmax.f32 %v227, 0.0
        %v232 = vmax.f32 %v228, 0.0
        %v233 = vmax.f32 %v229, 0.0
        %v234 = vmin.f32 %v230, 255.0
        %v235 = vmin.f32 %v231, 255.0
        %v236 = vmin.f32 %v232, 255.0
        %v237 = vmin.f32 %v233, 255.0
        %v238 = vcvt.f32.s32.to.zero.pseudo %v234
        %v239 = vcvt.f32.s32.to.zero.pseudo %v235
        %v240 = vcvt.f32.s32.to.zero.pseudo %v236
        %v241 = vcvt.f32.s32.to.zero.pseudo %v237
        %v242 = vpack.c.b16 %v239, %v238
        %v243 = vpack.c.b16 %v241, %v240
        %v244 = vpack.c.b8 %v243, %v242
        %s245 = scalar_lea.vmem %s152, 8 [#allocation5]
        %246 = vst [vmem:[%s245] sm:$0xff] %v244
        %v247 = vround.ne.pseudo %v186
        %v248 = vround.ne.pseudo %v187
        %v249 = vround.ne.pseudo %v188
        %v250 = vround.ne.pseudo %v189
        %v251 = vmax.f32 %v247, 0.0
        %v252 = vmax.f32 %v248, 0.0
        %v253 = vmax.f32 %v249, 0.0
        %v254 = vmax.f32 %v250, 0.0
        %v255 = vmin.f32 %v251, 255.0
        %v256 = vmin.f32 %v252, 255.0
        %v257 = vmin.f32 %v253, 255.0
        %v258 = vmin.f32 %v254, 255.0
        %v259 = vmax.f32 %v255, 0.0
        %v260 = vmax.f32 %v256, 0.0
        %v261 = vmax.f32 %v257, 0.0
        %v262 = vmax.f32 %v258, 0.0
        %v263 = vmin.f32 %v259, 255.0
        %v264 = vmin.f32 %v260, 255.0
        %v265 = vmin.f32 %v261, 255.0
        %v266 = vmin.f32 %v262, 255.0
        %v267 = vcvt.f32.s32.to.zero.pseudo %v263
        %v268 = vcvt.f32.s32.to.zero.pseudo %v264
        %v269 = vcvt.f32.s32.to.zero.pseudo %v265
        %v270 = vcvt.f32.s32.to.zero.pseudo %v266
        %v271 = vpack.c.b16 %v268, %v267
        %v272 = vpack.c.b16 %v270, %v269
        %v273 = vpack.c.b8 %v272, %v271
        %s274 = scalar_lea.vmem %s152, 16 [#allocation5]
        %275 = vst [vmem:[%s274] sm:$0xff] %v273
        %v276 = vmul.f32 %v162, 0.299
        %v277 = vmul.f32 %v163, 0.299
        %v278 = vmul.f32 %v164, 0.299
        %v279 = vmul.f32 %v165, 0.299
        %v280 = vmul.f32 %v174, 0.587
        %v281 = vmul.f32 %v175, 0.587
        %v282 = vmul.f32 %v176, 0.587
        %v283 = vmul.f32 %v177, 0.587
        %v284 = vadd.f32 %v276, %v280
        %v285 = vadd.f32 %v277, %v281
        %v286 = vadd.f32 %v278, %v282
        %v287 = vadd.f32 %v279, %v283
        %v288 = vmul.f32 %v186, 0.114
        %v289 = vmul.f32 %v187, 0.114
        %v290 = vmul.f32 %v188, 0.114
        %v291 = vmul.f32 %v189, 0.114
        %v292 = vadd.f32 %v284, %v288
        %v293 = vadd.f32 %v285, %v289
        %v294 = vadd.f32 %v286, %v290
        %v295 = vadd.f32 %v287, %v291
        %v296 = vround.ne.pseudo %v292
        %v297 = vround.ne.pseudo %v293
        %v298 = vround.ne.pseudo %v294
        %v299 = vround.ne.pseudo %v295
        %v300 = vmax.f32 %v296, 0.0
        %v301 = vmax.f32 %v297, 0.0
        %v302 = vmax.f32 %v298, 0.0
        %v303 = vmax.f32 %v299, 0.0
        %v304 = vmin.f32 %v300, 255.0
        %v305 = vmin.f32 %v301, 255.0
        %v306 = vmin.f32 %v302, 255.0
        %v307 = vmin.f32 %v303, 255.0
        %v308 = vmax.f32 %v304, 0.0
        %v309 = vmax.f32 %v305, 0.0
        %v310 = vmax.f32 %v306, 0.0
        %v311 = vmax.f32 %v307, 0.0
        %v312 = vmin.f32 %v308, 255.0
        %v313 = vmin.f32 %v309, 255.0
        %v314 = vmin.f32 %v310, 255.0
        %v315 = vmin.f32 %v311, 255.0
        %v316 = vcvt.f32.s32.to.zero.pseudo %v312
        %v317 = vcvt.f32.s32.to.zero.pseudo %v313
        %v318 = vcvt.f32.s32.to.zero.pseudo %v314
        %v319 = vcvt.f32.s32.to.zero.pseudo %v315
        %v320 = vpack.c.b16 %v317, %v316
        %v321 = vpack.c.b16 %v319, %v318
        %v322 = vpack.c.b8 %v321, %v320
        %s323 = scalar_lea.vmem %s152, 24 [#allocation5]
        %324 = vst [vmem:[%s323] sm:$0xff] %v322
        %v325 = vsub.f32 %v186, %v292
        %v326 = vsub.f32 %v187, %v293
        %v327 = vsub.f32 %v188, %v294
        %v328 = vsub.f32 %v189, %v295
        %v329 = vmul.f32 %v325, 0.492
        %v330 = vmul.f32 %v326, 0.492
        %v331 = vmul.f32 %v327, 0.492
        %v332 = vmul.f32 %v328, 0.492
        %v333 = vadd.f32 %v329, 128.0
        %v334 = vadd.f32 %v330, 128.0
        %v335 = vadd.f32 %v331, 128.0
        %v336 = vadd.f32 %v332, 128.0
        %v337 = vround.ne.pseudo %v333
        %v338 = vround.ne.pseudo %v334
        %v339 = vround.ne.pseudo %v335
        %v340 = vround.ne.pseudo %v336
        %v341 = vmax.f32 %v337, 0.0
        %v342 = vmax.f32 %v338, 0.0
        %v343 = vmax.f32 %v339, 0.0
        %v344 = vmax.f32 %v340, 0.0
        %v345 = vmin.f32 %v341, 255.0
        %v346 = vmin.f32 %v342, 255.0
        %v347 = vmin.f32 %v343, 255.0
        %v348 = vmin.f32 %v344, 255.0
        %v349 = vmax.f32 %v345, 0.0
        %v350 = vmax.f32 %v346, 0.0
        %v351 = vmax.f32 %v347, 0.0
        %v352 = vmax.f32 %v348, 0.0
        %v353 = vmin.f32 %v349, 255.0
        %v354 = vmin.f32 %v350, 255.0
        %v355 = vmin.f32 %v351, 255.0
        %v356 = vmin.f32 %v352, 255.0
        %v357 = vcvt.f32.s32.to.zero.pseudo %v353
        %v358 = vcvt.f32.s32.to.zero.pseudo %v354
        %v359 = vcvt.f32.s32.to.zero.pseudo %v355
        %v360 = vcvt.f32.s32.to.zero.pseudo %v356
        %v361 = vpack.c.b16 %v358, %v357
        %v362 = vpack.c.b16 %v360, %v359
        %v363 = vpack.c.b8 %v362, %v361
        %s364 = scalar_lea.vmem %s152, 32 [#allocation5]
        %365 = vst [vmem:[%s364] sm:$0xff] %v363
        %v366 = vsub.f32 %v162, %v292
        %v367 = vsub.f32 %v163, %v293
        %v368 = vsub.f32 %v164, %v294
        %v369 = vsub.f32 %v165, %v295
        %v370 = vmul.f32 %v366, 0.877
        %v371 = vmul.f32 %v367, 0.877
        %v372 = vmul.f32 %v368, 0.877
        %v373 = vmul.f32 %v369, 0.877
        %v374 = vadd.f32 %v370, 128.0
        %v375 = vadd.f32 %v371, 128.0
        %v376 = vadd.f32 %v372, 128.0
        %v377 = vadd.f32 %v373, 128.0
        %v378 = vround.ne.pseudo %v374
        %v379 = vround.ne.pseudo %v375
        %v380 = vround.ne.pseudo %v376
        %v381 = vround.ne.pseudo %v377
        %v382 = vmax.f32 %v378, 0.0
        %v383 = vmax.f32 %v379, 0.0
        %v384 = vmax.f32 %v380, 0.0
        %v385 = vmax.f32 %v381, 0.0
        %v386 = vmin.f32 %v382, 255.0
        %v387 = vmin.f32 %v383, 255.0
        %v388 = vmin.f32 %v384, 255.0
        %v389 = vmin.f32 %v385, 255.0
        %v390 = vmax.f32 %v386, 0.0
        %v391 = vmax.f32 %v387, 0.0
        %v392 = vmax.f32 %v388, 0.0
        %v393 = vmax.f32 %v389, 0.0
        %v394 = vmin.f32 %v390, 255.0
        %v395 = vmin.f32 %v391, 255.0
        %v396 = vmin.f32 %v392, 255.0
        %v397 = vmin.f32 %v393, 255.0
        %v398 = vcvt.f32.s32.to.zero.pseudo %v394
        %v399 = vcvt.f32.s32.to.zero.pseudo %v395
        %v400 = vcvt.f32.s32.to.zero.pseudo %v396
        %v401 = vcvt.f32.s32.to.zero.pseudo %v397
        %v402 = vpack.c.b16 %v399, %v398
        %v403 = vpack.c.b16 %v401, %v400
        %v404 = vpack.c.b8 %v403, %v402
        %s405 = scalar_lea.vmem %s152, 40 [#allocation5]
        %406 = vst [vmem:[%s405] sm:$0xff] %v404
        %v407 = vmax.f32 %v162, %v174
        %v408 = vmax.f32 %v163, %v175
        %v409 = vmax.f32 %v164, %v176
        %v410 = vmax.f32 %v165, %v177
        %v411 = vmax.f32 %v407, %v186
        %v412 = vmax.f32 %v408, %v187
        %v413 = vmax.f32 %v409, %v188
        %v414 = vmax.f32 %v410, %v189
        %v415 = vmin.f32 %v162, %v174
        %v416 = vmin.f32 %v163, %v175
        %v417 = vmin.f32 %v164, %v176
        %v418 = vmin.f32 %v165, %v177
        %v419 = vmin.f32 %v415, %v186
        %v420 = vmin.f32 %v416, %v187
        %v421 = vmin.f32 %v417, %v188
        %v422 = vmin.f32 %v418, %v189
        %v423 = vsub.f32 %v411, %v419
        %v424 = vsub.f32 %v412, %v420
        %v425 = vsub.f32 %v413, %v421
        %v426 = vsub.f32 %v414, %v422
        %vm427 = vcmp.gt.f32.partialorder %v423, 0.0
        %vm428 = vcmp.gt.f32.partialorder %v424, 0.0
        %vm429 = vcmp.gt.f32.partialorder %v425, 0.0
        %vm430 = vcmp.gt.f32.partialorder %v426, 0.0
        %v431 = vsel %vm427, %v423, 1.0
        %v432 = vsel %vm428, %v424, 1.0
        %v433 = vsel %vm429, %v425, 1.0
        %v434 = vsel %vm430, %v426, 1.0
        %v435 = vrcp.pop %v431
        %v436 = vrcp.pop %v432
        %v437 = vrcp.pop %v433
        %v438 = vrcp.pop %v434
        %vm439 = vcmp.gt.f32.partialorder %v411, 0.0
        %vm440 = vcmp.gt.f32.partialorder %v412, 0.0
        %vm441 = vcmp.gt.f32.partialorder %v413, 0.0
        %vm442 = vcmp.gt.f32.partialorder %v414, 0.0
        %v443 = vsel %vm439, %v411, 1.0
        %v444 = vsel %vm440, %v412, 1.0
        %v445 = vsel %vm441, %v413, 1.0
        %v446 = vsel %vm442, %v414, 1.0
        %v447 = vrcp.pop %v443
        %v448 = vrcp.pop %v444
        %v449 = vrcp.pop %v445
        %v450 = vrcp.pop %v446
        %vm451 = vcmp.eq.f32.partialorder %v411, %v162
        %vm452 = vcmp.eq.f32.partialorder %v412, %v163
        %vm453 = vcmp.eq.f32.partialorder %v413, %v164
        %vm454 = vcmp.eq.f32.partialorder %v414, %v165
        %v455 = vsub.f32 %v174, %v186
        %v456 = vsub.f32 %v175, %v187
        %v457 = vsub.f32 %v176, %v188
        %v458 = vsub.f32 %v177, %v189
        %v459 = vmul.f32 %v455, 60.0
        %v460 = vmul.f32 %v456, 60.0
        %v461 = vmul.f32 %v457, 60.0
        %v462 = vmul.f32 %v458, 60.0
        %v463 = vmul.f32 %v459, %v435
        %v464 = vmul.f32 %v460, %v436
        %v465 = vmul.f32 %v461, %v437
        %v466 = vmul.f32 %v462, %v438
        %vm467 = vcmp.eq.f32.partialorder %v411, %v174
        %vm468 = vcmp.eq.f32.partialorder %v412, %v175
        %vm469 = vcmp.eq.f32.partialorder %v413, %v176
        %vm470 = vcmp.eq.f32.partialorder %v414, %v177
        %v471 = vsub.f32 %v186, %v162
        %v472 = vsub.f32 %v187, %v163
        %v473 = vsub.f32 %v188, %v164
        %v474 = vsub.f32 %v189, %v165
        %v475 = vmul.f32 %v471, 60.0
        %v476 = vmul.f32 %v472, 60.0
        %v477 = vmul.f32 %v473, 60.0
        %v478 = vmul.f32 %v474, 60.0
        %v479 = vmul.f32 %v475, %v435
        %v480 = vmul.f32 %v476, %v436
        %v481 = vmul.f32 %v477, %v437
        %v482 = vmul.f32 %v478, %v438
        %v483 = vadd.f32 %v479, 120.0
        %v484 = vadd.f32 %v480, 120.0
        %v485 = vadd.f32 %v481, 120.0
        %v486 = vadd.f32 %v482, 120.0
        %v487 = vsub.f32 %v162, %v174
        %v488 = vsub.f32 %v163, %v175
        %v489 = vsub.f32 %v164, %v176
        %v490 = vsub.f32 %v165, %v177
        %v491 = vmul.f32 %v487, 60.0
        %v492 = vmul.f32 %v488, 60.0
        %v493 = vmul.f32 %v489, 60.0
        %v494 = vmul.f32 %v490, 60.0
        %v495 = vmul.f32 %v491, %v435
        %v496 = vmul.f32 %v492, %v436
        %v497 = vmul.f32 %v493, %v437
        %v498 = vmul.f32 %v494, %v438
        %v499 = vadd.f32 %v495, 240.0
        %v500 = vadd.f32 %v496, 240.0
        %v501 = vadd.f32 %v497, 240.0
        %v502 = vadd.f32 %v498, 240.0
        %v503 = vsel %vm467, %v483, %v499
        %v504 = vsel %vm468, %v484, %v500
        %v505 = vsel %vm469, %v485, %v501
        %v506 = vsel %vm470, %v486, %v502
        %v507 = vsel %vm451, %v463, %v503
        %v508 = vsel %vm452, %v464, %v504
        %v509 = vsel %vm453, %v465, %v505
        %v510 = vsel %vm454, %v466, %v506
        %vm511 = vcmp.lt.f32.partialorder %v507, 0.0
        %vm512 = vcmp.lt.f32.partialorder %v508, 0.0
        %vm513 = vcmp.lt.f32.partialorder %v509, 0.0
        %vm514 = vcmp.lt.f32.partialorder %v510, 0.0
        %v515 = vadd.f32 %v507, 360.0
        %v516 = vadd.f32 %v508, 360.0
        %v517 = vadd.f32 %v509, 360.0
        %v518 = vadd.f32 %v510, 360.0
        %v519 = vsel %vm511, %v515, %v507
        %v520 = vsel %vm512, %v516, %v508
        %v521 = vsel %vm513, %v517, %v509
        %v522 = vsel %vm514, %v518, %v510
        %v523 = vmul.f32 %v519, 0.5
        %v524 = vmul.f32 %v520, 0.5
        %v525 = vmul.f32 %v521, 0.5
        %v526 = vmul.f32 %v522, 0.5
        %v527 = vsel %vm427, %v523, 0.0
        %v528 = vsel %vm428, %v524, 0.0
        %v529 = vsel %vm429, %v525, 0.0
        %v530 = vsel %vm430, %v526, 0.0
        %v531 = vmul.f32 %v423, %v447
        %v532 = vmul.f32 %v424, %v448
        %v533 = vmul.f32 %v425, %v449
        %v534 = vmul.f32 %v426, %v450
        %v535 = vmul.f32 %v531, 255.0
        %v536 = vmul.f32 %v532, 255.0
        %v537 = vmul.f32 %v533, 255.0
        %v538 = vmul.f32 %v534, 255.0
        %v539 = vsel %vm439, %v535, 0.0
        %v540 = vsel %vm440, %v536, 0.0
        %v541 = vsel %vm441, %v537, 0.0
        %v542 = vsel %vm442, %v538, 0.0
        %v543 = vround.ne.pseudo %v527
        %v544 = vround.ne.pseudo %v528
        %v545 = vround.ne.pseudo %v529
        %v546 = vround.ne.pseudo %v530
        %v547 = vmax.f32 %v543, 0.0
        %v548 = vmax.f32 %v544, 0.0
        %v549 = vmax.f32 %v545, 0.0
        %v550 = vmax.f32 %v546, 0.0
        %v551 = vmin.f32 %v547, 255.0
        %v552 = vmin.f32 %v548, 255.0
        %v553 = vmin.f32 %v549, 255.0
        %v554 = vmin.f32 %v550, 255.0
        %v555 = vmax.f32 %v551, 0.0
        %v556 = vmax.f32 %v552, 0.0
        %v557 = vmax.f32 %v553, 0.0
        %v558 = vmax.f32 %v554, 0.0
        %v559 = vmin.f32 %v555, 255.0
        %v560 = vmin.f32 %v556, 255.0
        %v561 = vmin.f32 %v557, 255.0
        %v562 = vmin.f32 %v558, 255.0
        %v563 = vcvt.f32.s32.to.zero.pseudo %v559
        %v564 = vcvt.f32.s32.to.zero.pseudo %v560
        %v565 = vcvt.f32.s32.to.zero.pseudo %v561
        %v566 = vcvt.f32.s32.to.zero.pseudo %v562
        %v567 = vpack.c.b16 %v564, %v563
        %v568 = vpack.c.b16 %v566, %v565
        %v569 = vpack.c.b8 %v568, %v567
        %s570 = scalar_lea.vmem %s152, 48 [#allocation5]
        %571 = vst [vmem:[%s570] sm:$0xff] %v569
        %v572 = vround.ne.pseudo %v539
        %v573 = vround.ne.pseudo %v540
        %v574 = vround.ne.pseudo %v541
        %v575 = vround.ne.pseudo %v542
        %v576 = vmax.f32 %v572, 0.0
        %v577 = vmax.f32 %v573, 0.0
        %v578 = vmax.f32 %v574, 0.0
        %v579 = vmax.f32 %v575, 0.0
        %v580 = vmin.f32 %v576, 255.0
        %v581 = vmin.f32 %v577, 255.0
        %v582 = vmin.f32 %v578, 255.0
        %v583 = vmin.f32 %v579, 255.0
        %v584 = vmax.f32 %v580, 0.0
        %v585 = vmax.f32 %v581, 0.0
        %v586 = vmax.f32 %v582, 0.0
        %v587 = vmax.f32 %v583, 0.0
        %v588 = vmin.f32 %v584, 255.0
        %v589 = vmin.f32 %v585, 255.0
        %v590 = vmin.f32 %v586, 255.0
        %v591 = vmin.f32 %v587, 255.0
        %v592 = vcvt.f32.s32.to.zero.pseudo %v588
        %v593 = vcvt.f32.s32.to.zero.pseudo %v589
        %v594 = vcvt.f32.s32.to.zero.pseudo %v590
        %v595 = vcvt.f32.s32.to.zero.pseudo %v591
        %v596 = vpack.c.b16 %v593, %v592
        %v597 = vpack.c.b16 %v595, %v594
        %v598 = vpack.c.b8 %v597, %v596
        %s599 = scalar_lea.vmem %s152, 56 [#allocation5]
        %600 = vst [vmem:[%s599] sm:$0xff] %v598
        %v601 = vround.ne.pseudo %v411
        %v602 = vround.ne.pseudo %v412
        %v603 = vround.ne.pseudo %v413
        %v604 = vround.ne.pseudo %v414
        %v605 = vmax.f32 %v601, 0.0
        %v606 = vmax.f32 %v602, 0.0
        %v607 = vmax.f32 %v603, 0.0
        %v608 = vmax.f32 %v604, 0.0
        %v609 = vmin.f32 %v605, 255.0
        %v610 = vmin.f32 %v606, 255.0
        %v611 = vmin.f32 %v607, 255.0
        %v612 = vmin.f32 %v608, 255.0
        %v613 = vmax.f32 %v609, 0.0
        %v614 = vmax.f32 %v610, 0.0
        %v615 = vmax.f32 %v611, 0.0
        %v616 = vmax.f32 %v612, 0.0
        %v617 = vmin.f32 %v613, 255.0
        %v618 = vmin.f32 %v614, 255.0
        %v619 = vmin.f32 %v615, 255.0
        %v620 = vmin.f32 %v616, 255.0
        %v621 = vcvt.f32.s32.to.zero.pseudo %v617
        %v622 = vcvt.f32.s32.to.zero.pseudo %v618
        %v623 = vcvt.f32.s32.to.zero.pseudo %v619
        %v624 = vcvt.f32.s32.to.zero.pseudo %v620
        %v625 = vpack.c.b16 %v622, %v621
        %v626 = vpack.c.b16 %v624, %v623
        %v627 = vpack.c.b8 %v626, %v625
        %s628 = scalar_lea.vmem %s152, 64 [#allocation5]
        %629 = vst [vmem:[%s628] sm:$0xff] %v627
        %v630 = vmul.f32 %v162, 0.003921569
        %v631 = vmul.f32 %v163, 0.003921569
        %v632 = vmul.f32 %v164, 0.003921569
        %v633 = vmul.f32 %v165, 0.003921569
        %v634 = vadd.f32 %v630, 0.055
        %v635 = vadd.f32 %v631, 0.055
        %v636 = vadd.f32 %v632, 0.055
        %v637 = vadd.f32 %v633, 0.055
        %v638 = vmul.f32 %v634, 0.9478673
        %v639 = vmul.f32 %v635, 0.9478673
        %v640 = vmul.f32 %v636, 0.9478673
        %v641 = vmul.f32 %v637, 0.9478673
        %v642 = vmul.f32 %v638, %v638
        %v643 = vmul.f32 %v639, %v639
        %v644 = vmul.f32 %v640, %v640
        %v645 = vmul.f32 %v641, %v641
        %v650 = vcvt.s32.f32 %v642
        %v651 = vcvt.s32.f32 %v643
        %v652 = vcvt.s32.f32 %v644
        %v653 = vcvt.s32.f32 %v645
        %v654 = vmul.f32 %v650, 0.2
        %v655 = vmul.f32 %v651, 0.2
        %v656 = vmul.f32 %v652, 0.2
        %v657 = vmul.f32 %v653, 0.2
        %v658 = vsub.f32 1.2779704e+09, %v654
        %v659 = vsub.f32 1.2779704e+09, %v655
        %v660 = vsub.f32 1.2779704e+09, %v656
        %v661 = vsub.f32 1.2779704e+09, %v657
        %v662 = vcvt.f32.s32.to.zero.pseudo %v658
        %v663 = vcvt.f32.s32.to.zero.pseudo %v659
        %v664 = vcvt.f32.s32.to.zero.pseudo %v660
        %v665 = vcvt.f32.s32.to.zero.pseudo %v661
        %v670 = vmul.f32 %v662, %v662
        %v671 = vmul.f32 %v663, %v663
        %v672 = vmul.f32 %v664, %v664
        %v673 = vmul.f32 %v665, %v665
        %v674 = vmul.f32 %v642, %v670
        %v675 = vmul.f32 %v643, %v671
        %v676 = vmul.f32 %v644, %v672
        %v677 = vmul.f32 %v645, %v673
        %v678 = vmul.f32 %v674, %v670
        %v679 = vmul.f32 %v675, %v671
        %v680 = vmul.f32 %v676, %v672
        %v681 = vmul.f32 %v677, %v673
        %v682 = vmul.f32 %v678, %v662
        %v683 = vmul.f32 %v679, %v663
        %v684 = vmul.f32 %v680, %v664
        %v685 = vmul.f32 %v681, %v665
        %v686 = vsub.f32 6.0, %v682
        %v687 = vsub.f32 6.0, %v683
        %v688 = vsub.f32 6.0, %v684
        %v689 = vsub.f32 6.0, %v685
        %v690 = vmul.f32 %v662, %v686
        %v691 = vmul.f32 %v663, %v687
        %v692 = vmul.f32 %v664, %v688
        %v693 = vmul.f32 %v665, %v689
        %v694 = vmul.f32 %v690, 0.2
        %v695 = vmul.f32 %v691, 0.2
        %v696 = vmul.f32 %v692, 0.2
        %v697 = vmul.f32 %v693, 0.2
        %v698 = vmul.f32 %v694, %v694
        %v699 = vmul.f32 %v695, %v695
        %v700 = vmul.f32 %v696, %v696
        %v701 = vmul.f32 %v697, %v697
        %v702 = vmul.f32 %v642, %v698
        %v703 = vmul.f32 %v643, %v699
        %v704 = vmul.f32 %v644, %v700
        %v705 = vmul.f32 %v645, %v701
        %v706 = vmul.f32 %v702, %v698
        %v707 = vmul.f32 %v703, %v699
        %v708 = vmul.f32 %v704, %v700
        %v709 = vmul.f32 %v705, %v701
        %v710 = vmul.f32 %v706, %v694
        %v711 = vmul.f32 %v707, %v695
        %v712 = vmul.f32 %v708, %v696
        %v713 = vmul.f32 %v709, %v697
        %v714 = vsub.f32 6.0, %v710
        %v715 = vsub.f32 6.0, %v711
        %v716 = vsub.f32 6.0, %v712
        %v717 = vsub.f32 6.0, %v713
        %v718 = vmul.f32 %v694, %v714
        %v719 = vmul.f32 %v695, %v715
        %v720 = vmul.f32 %v696, %v716
        %v721 = vmul.f32 %v697, %v717
        %v722 = vmul.f32 %v718, 0.2
        %v723 = vmul.f32 %v719, 0.2
        %v724 = vmul.f32 %v720, 0.2
        %v725 = vmul.f32 %v721, 0.2
        %v726 = vmul.f32 %v722, %v722
        %v727 = vmul.f32 %v723, %v723
        %v728 = vmul.f32 %v724, %v724
        %v729 = vmul.f32 %v725, %v725
        %v730 = vmul.f32 %v642, %v642
        %v731 = vmul.f32 %v643, %v643
        %v732 = vmul.f32 %v644, %v644
        %v733 = vmul.f32 %v645, %v645
        %v734 = vmul.f32 %v730, %v726
        %v735 = vmul.f32 %v731, %v727
        %v736 = vmul.f32 %v732, %v728
        %v737 = vmul.f32 %v733, %v729
        %v738 = vmul.f32 %v734, %v726
        %v739 = vmul.f32 %v735, %v727
        %v740 = vmul.f32 %v736, %v728
        %v741 = vmul.f32 %v737, %v729
        %vm742 = vcmp.le.f32.partialorder %v630, 0.04045
        %vm743 = vcmp.le.f32.partialorder %v631, 0.04045
        %vm744 = vcmp.le.f32.partialorder %v632, 0.04045
        %vm745 = vcmp.le.f32.partialorder %v633, 0.04045
        %v746 = vmul.f32 %v630, 0.07739938
        %v747 = vmul.f32 %v631, 0.07739938
        %v748 = vmul.f32 %v632, 0.07739938
        %v749 = vmul.f32 %v633, 0.07739938
        %v750 = vsel %vm742, %v746, %v738
        %v751 = vsel %vm743, %v747, %v739
        %v752 = vsel %vm744, %v748, %v740
        %v753 = vsel %vm745, %v749, %v741
        %v754 = vmul.f32 %v174, 0.003921569
        %v755 = vmul.f32 %v175, 0.003921569
        %v756 = vmul.f32 %v176, 0.003921569
        %v757 = vmul.f32 %v177, 0.003921569
        %v758 = vadd.f32 %v754, 0.055
        %v759 = vadd.f32 %v755, 0.055
        %v760 = vadd.f32 %v756, 0.055
        %v761 = vadd.f32 %v757, 0.055
        %v762 = vmul.f32 %v758, 0.9478673
        %v763 = vmul.f32 %v759, 0.9478673
        %v764 = vmul.f32 %v760, 0.9478673
        %v765 = vmul.f32 %v761, 0.9478673
        %v766 = vmul.f32 %v762, %v762
        %v767 = vmul.f32 %v763, %v763
        %v768 = vmul.f32 %v764, %v764
        %v769 = vmul.f32 %v765, %v765
        %v774 = vcvt.s32.f32 %v766
        %v775 = vcvt.s32.f32 %v767
        %v776 = vcvt.s32.f32 %v768
        %v777 = vcvt.s32.f32 %v769
        %v778 = vmul.f32 %v774, 0.2
        %v779 = vmul.f32 %v775, 0.2
        %v780 = vmul.f32 %v776, 0.2
        %v781 = vmul.f32 %v777, 0.2
        %v782 = vsub.f32 1.2779704e+09, %v778
        %v783 = vsub.f32 1.2779704e+09, %v779
        %v784 = vsub.f32 1.2779704e+09, %v780
        %v785 = vsub.f32 1.2779704e+09, %v781
        %v786 = vcvt.f32.s32.to.zero.pseudo %v782
        %v787 = vcvt.f32.s32.to.zero.pseudo %v783
        %v788 = vcvt.f32.s32.to.zero.pseudo %v784
        %v789 = vcvt.f32.s32.to.zero.pseudo %v785
        %v794 = vmul.f32 %v786, %v786
        %v795 = vmul.f32 %v787, %v787
        %v796 = vmul.f32 %v788, %v788
        %v797 = vmul.f32 %v789, %v789
        %v798 = vmul.f32 %v766, %v794
        %v799 = vmul.f32 %v767, %v795
        %v800 = vmul.f32 %v768, %v796
        %v801 = vmul.f32 %v769, %v797
        %v802 = vmul.f32 %v798, %v794
        %v803 = vmul.f32 %v799, %v795
        %v804 = vmul.f32 %v800, %v796
        %v805 = vmul.f32 %v801, %v797
        %v806 = vmul.f32 %v802, %v786
        %v807 = vmul.f32 %v803, %v787
        %v808 = vmul.f32 %v804, %v788
        %v809 = vmul.f32 %v805, %v789
        %v810 = vsub.f32 6.0, %v806
        %v811 = vsub.f32 6.0, %v807
        %v812 = vsub.f32 6.0, %v808
        %v813 = vsub.f32 6.0, %v809
        %v814 = vmul.f32 %v786, %v810
        %v815 = vmul.f32 %v787, %v811
        %v816 = vmul.f32 %v788, %v812
        %v817 = vmul.f32 %v789, %v813
        %v818 = vmul.f32 %v814, 0.2
        %v819 = vmul.f32 %v815, 0.2
        %v820 = vmul.f32 %v816, 0.2
        %v821 = vmul.f32 %v817, 0.2
        %v822 = vmul.f32 %v818, %v818
        %v823 = vmul.f32 %v819, %v819
        %v824 = vmul.f32 %v820, %v820
        %v825 = vmul.f32 %v821, %v821
        %v826 = vmul.f32 %v766, %v822
        %v827 = vmul.f32 %v767, %v823
        %v828 = vmul.f32 %v768, %v824
        %v829 = vmul.f32 %v769, %v825
        %v830 = vmul.f32 %v826, %v822
        %v831 = vmul.f32 %v827, %v823
        %v832 = vmul.f32 %v828, %v824
        %v833 = vmul.f32 %v829, %v825
        %v834 = vmul.f32 %v830, %v818
        %v835 = vmul.f32 %v831, %v819
        %v836 = vmul.f32 %v832, %v820
        %v837 = vmul.f32 %v833, %v821
        %v838 = vsub.f32 6.0, %v834
        %v839 = vsub.f32 6.0, %v835
        %v840 = vsub.f32 6.0, %v836
        %v841 = vsub.f32 6.0, %v837
        %v842 = vmul.f32 %v818, %v838
        %v843 = vmul.f32 %v819, %v839
        %v844 = vmul.f32 %v820, %v840
        %v845 = vmul.f32 %v821, %v841
        %v846 = vmul.f32 %v842, 0.2
        %v847 = vmul.f32 %v843, 0.2
        %v848 = vmul.f32 %v844, 0.2
        %v849 = vmul.f32 %v845, 0.2
        %v850 = vmul.f32 %v846, %v846
        %v851 = vmul.f32 %v847, %v847
        %v852 = vmul.f32 %v848, %v848
        %v853 = vmul.f32 %v849, %v849
        %v854 = vmul.f32 %v766, %v766
        %v855 = vmul.f32 %v767, %v767
        %v856 = vmul.f32 %v768, %v768
        %v857 = vmul.f32 %v769, %v769
        %v858 = vmul.f32 %v854, %v850
        %v859 = vmul.f32 %v855, %v851
        %v860 = vmul.f32 %v856, %v852
        %v861 = vmul.f32 %v857, %v853
        %v862 = vmul.f32 %v858, %v850
        %v863 = vmul.f32 %v859, %v851
        %v864 = vmul.f32 %v860, %v852
        %v865 = vmul.f32 %v861, %v853
        %vm866 = vcmp.le.f32.partialorder %v754, 0.04045
        %vm867 = vcmp.le.f32.partialorder %v755, 0.04045
        %vm868 = vcmp.le.f32.partialorder %v756, 0.04045
        %vm869 = vcmp.le.f32.partialorder %v757, 0.04045
        %v870 = vmul.f32 %v754, 0.07739938
        %v871 = vmul.f32 %v755, 0.07739938
        %v872 = vmul.f32 %v756, 0.07739938
        %v873 = vmul.f32 %v757, 0.07739938
        %v874 = vsel %vm866, %v870, %v862
        %v875 = vsel %vm867, %v871, %v863
        %v876 = vsel %vm868, %v872, %v864
        %v877 = vsel %vm869, %v873, %v865
        %v878 = vmul.f32 %v186, 0.003921569
        %v879 = vmul.f32 %v187, 0.003921569
        %v880 = vmul.f32 %v188, 0.003921569
        %v881 = vmul.f32 %v189, 0.003921569
        %v882 = vadd.f32 %v878, 0.055
        %v883 = vadd.f32 %v879, 0.055
        %v884 = vadd.f32 %v880, 0.055
        %v885 = vadd.f32 %v881, 0.055
        %v886 = vmul.f32 %v882, 0.9478673
        %v887 = vmul.f32 %v883, 0.9478673
        %v888 = vmul.f32 %v884, 0.9478673
        %v889 = vmul.f32 %v885, 0.9478673
        %v890 = vmul.f32 %v886, %v886
        %v891 = vmul.f32 %v887, %v887
        %v892 = vmul.f32 %v888, %v888
        %v893 = vmul.f32 %v889, %v889
        %v898 = vcvt.s32.f32 %v890
        %v899 = vcvt.s32.f32 %v891
        %v900 = vcvt.s32.f32 %v892
        %v901 = vcvt.s32.f32 %v893
        %v902 = vmul.f32 %v898, 0.2
        %v903 = vmul.f32 %v899, 0.2
        %v904 = vmul.f32 %v900, 0.2
        %v905 = vmul.f32 %v901, 0.2
        %v906 = vsub.f32 1.2779704e+09, %v902
        %v907 = vsub.f32 1.2779704e+09, %v903
        %v908 = vsub.f32 1.2779704e+09, %v904
        %v909 = vsub.f32 1.2779704e+09, %v905
        %v910 = vcvt.f32.s32.to.zero.pseudo %v906
        %v911 = vcvt.f32.s32.to.zero.pseudo %v907
        %v912 = vcvt.f32.s32.to.zero.pseudo %v908
        %v913 = vcvt.f32.s32.to.zero.pseudo %v909
        %v918 = vmul.f32 %v910, %v910
        %v919 = vmul.f32 %v911, %v911
        %v920 = vmul.f32 %v912, %v912
        %v921 = vmul.f32 %v913, %v913
        %v922 = vmul.f32 %v890, %v918
        %v923 = vmul.f32 %v891, %v919
        %v924 = vmul.f32 %v892, %v920
        %v925 = vmul.f32 %v893, %v921
        %v926 = vmul.f32 %v922, %v918
        %v927 = vmul.f32 %v923, %v919
        %v928 = vmul.f32 %v924, %v920
        %v929 = vmul.f32 %v925, %v921
        %v930 = vmul.f32 %v926, %v910
        %v931 = vmul.f32 %v927, %v911
        %v932 = vmul.f32 %v928, %v912
        %v933 = vmul.f32 %v929, %v913
        %v934 = vsub.f32 6.0, %v930
        %v935 = vsub.f32 6.0, %v931
        %v936 = vsub.f32 6.0, %v932
        %v937 = vsub.f32 6.0, %v933
        %v938 = vmul.f32 %v910, %v934
        %v939 = vmul.f32 %v911, %v935
        %v940 = vmul.f32 %v912, %v936
        %v941 = vmul.f32 %v913, %v937
        %v942 = vmul.f32 %v938, 0.2
        %v943 = vmul.f32 %v939, 0.2
        %v944 = vmul.f32 %v940, 0.2
        %v945 = vmul.f32 %v941, 0.2
        %v946 = vmul.f32 %v942, %v942
        %v947 = vmul.f32 %v943, %v943
        %v948 = vmul.f32 %v944, %v944
        %v949 = vmul.f32 %v945, %v945
        %v950 = vmul.f32 %v890, %v946
        %v951 = vmul.f32 %v891, %v947
        %v952 = vmul.f32 %v892, %v948
        %v953 = vmul.f32 %v893, %v949
        %v954 = vmul.f32 %v950, %v946
        %v955 = vmul.f32 %v951, %v947
        %v956 = vmul.f32 %v952, %v948
        %v957 = vmul.f32 %v953, %v949
        %v958 = vmul.f32 %v954, %v942
        %v959 = vmul.f32 %v955, %v943
        %v960 = vmul.f32 %v956, %v944
        %v961 = vmul.f32 %v957, %v945
        %v962 = vsub.f32 6.0, %v958
        %v963 = vsub.f32 6.0, %v959
        %v964 = vsub.f32 6.0, %v960
        %v965 = vsub.f32 6.0, %v961
        %v966 = vmul.f32 %v942, %v962
        %v967 = vmul.f32 %v943, %v963
        %v968 = vmul.f32 %v944, %v964
        %v969 = vmul.f32 %v945, %v965
        %v970 = vmul.f32 %v966, 0.2
        %v971 = vmul.f32 %v967, 0.2
        %v972 = vmul.f32 %v968, 0.2
        %v973 = vmul.f32 %v969, 0.2
        %v974 = vmul.f32 %v970, %v970
        %v975 = vmul.f32 %v971, %v971
        %v976 = vmul.f32 %v972, %v972
        %v977 = vmul.f32 %v973, %v973
        %v978 = vmul.f32 %v890, %v890
        %v979 = vmul.f32 %v891, %v891
        %v980 = vmul.f32 %v892, %v892
        %v981 = vmul.f32 %v893, %v893
        %v982 = vmul.f32 %v978, %v974
        %v983 = vmul.f32 %v979, %v975
        %v984 = vmul.f32 %v980, %v976
        %v985 = vmul.f32 %v981, %v977
        %v986 = vmul.f32 %v982, %v974
        %v987 = vmul.f32 %v983, %v975
        %v988 = vmul.f32 %v984, %v976
        %v989 = vmul.f32 %v985, %v977
        %vm990 = vcmp.le.f32.partialorder %v878, 0.04045
        %vm991 = vcmp.le.f32.partialorder %v879, 0.04045
        %vm992 = vcmp.le.f32.partialorder %v880, 0.04045
        %vm993 = vcmp.le.f32.partialorder %v881, 0.04045
        %v994 = vmul.f32 %v878, 0.07739938
        %v995 = vmul.f32 %v879, 0.07739938
        %v996 = vmul.f32 %v880, 0.07739938
        %v997 = vmul.f32 %v881, 0.07739938
        %v998 = vsel %vm990, %v994, %v986
        %v999 = vsel %vm991, %v995, %v987
        %v1000 = vsel %vm992, %v996, %v988
        %v1001 = vsel %vm993, %v997, %v989
        %v1002 = vmul.f32 %v750, 0.43395275
        %v1003 = vmul.f32 %v751, 0.43395275
        %v1004 = vmul.f32 %v752, 0.43395275
        %v1005 = vmul.f32 %v753, 0.43395275
        %v1006 = vmul.f32 %v874, 0.37621942
        %v1007 = vmul.f32 %v875, 0.37621942
        %v1008 = vmul.f32 %v876, 0.37621942
        %v1009 = vmul.f32 %v877, 0.37621942
        %v1010 = vadd.f32 %v1002, %v1006
        %v1011 = vadd.f32 %v1003, %v1007
        %v1012 = vadd.f32 %v1004, %v1008
        %v1013 = vadd.f32 %v1005, %v1009
        %v1014 = vmul.f32 %v998, 0.18982783
        %v1015 = vmul.f32 %v999, 0.18982783
        %v1016 = vmul.f32 %v1000, 0.18982783
        %v1017 = vmul.f32 %v1001, 0.18982783
        %v1018 = vadd.f32 %v1010, %v1014
        %v1019 = vadd.f32 %v1011, %v1015
        %v1020 = vadd.f32 %v1012, %v1016
        %v1021 = vadd.f32 %v1013, %v1017
        %v1022 = vmul.f32 %v750, 0.212671
        %v1023 = vmul.f32 %v751, 0.212671
        %v1024 = vmul.f32 %v752, 0.212671
        %v1025 = vmul.f32 %v753, 0.212671
        %v1026 = vmul.f32 %v874, 0.71516
        %v1027 = vmul.f32 %v875, 0.71516
        %v1028 = vmul.f32 %v876, 0.71516
        %v1029 = vmul.f32 %v877, 0.71516
        %v1030 = vadd.f32 %v1022, %v1026
        %v1031 = vadd.f32 %v1023, %v1027
        %v1032 = vadd.f32 %v1024, %v1028
        %v1033 = vadd.f32 %v1025, %v1029
        %v1034 = vmul.f32 %v998, 0.072169
        %v1035 = vmul.f32 %v999, 0.072169
        %v1036 = vmul.f32 %v1000, 0.072169
        %v1037 = vmul.f32 %v1001, 0.072169
        %v1038 = vadd.f32 %v1030, %v1034
        %v1039 = vadd.f32 %v1031, %v1035
        %v1040 = vadd.f32 %v1032, %v1036
        %v1041 = vadd.f32 %v1033, %v1037
        %v1042 = vmul.f32 %v750, 0.017757915
        %v1043 = vmul.f32 %v751, 0.017757915
        %v1044 = vmul.f32 %v752, 0.017757915
        %v1045 = vmul.f32 %v753, 0.017757915
        %v1046 = vmul.f32 %v874, 0.10947652
        %v1047 = vmul.f32 %v875, 0.10947652
        %v1048 = vmul.f32 %v876, 0.10947652
        %v1049 = vmul.f32 %v877, 0.10947652
        %v1050 = vadd.f32 %v1042, %v1046
        %v1051 = vadd.f32 %v1043, %v1047
        %v1052 = vadd.f32 %v1044, %v1048
        %v1053 = vadd.f32 %v1045, %v1049
        %v1054 = vmul.f32 %v998, 0.87276554
        %v1055 = vmul.f32 %v999, 0.87276554
        %v1056 = vmul.f32 %v1000, 0.87276554
        %v1057 = vmul.f32 %v1001, 0.87276554
        %v1058 = vadd.f32 %v1050, %v1054
        %v1059 = vadd.f32 %v1051, %v1055
        %v1060 = vadd.f32 %v1052, %v1056
        %v1061 = vadd.f32 %v1053, %v1057
        %v1062 = vmax.f32 %v1018, 0.008856
        %v1063 = vmax.f32 %v1019, 0.008856
        %v1064 = vmax.f32 %v1020, 0.008856
        %v1065 = vmax.f32 %v1021, 0.008856
        %v1070 = vcvt.s32.f32 %v1062
        %v1071 = vcvt.s32.f32 %v1063
        %v1072 = vcvt.s32.f32 %v1064
        %v1073 = vcvt.s32.f32 %v1065
        %v1074 = vmul.f32 %v1070, 0.33333334
        %v1075 = vmul.f32 %v1071, 0.33333334
        %v1076 = vmul.f32 %v1072, 0.33333334
        %v1077 = vmul.f32 %v1073, 0.33333334
        %v1078 = vsub.f32 1.4199671e+09, %v1074
        %v1079 = vsub.f32 1.4199671e+09, %v1075
        %v1080 = vsub.f32 1.4199671e+09, %v1076
        %v1081 = vsub.f32 1.4199671e+09, %v1077
        %v1082 = vcvt.f32.s32.to.zero.pseudo %v1078
        %v1083 = vcvt.f32.s32.to.zero.pseudo %v1079
        %v1084 = vcvt.f32.s32.to.zero.pseudo %v1080
        %v1085 = vcvt.f32.s32.to.zero.pseudo %v1081
        %v1090 = vmul.f32 %v1062, %v1082
        %v1091 = vmul.f32 %v1063, %v1083
        %v1092 = vmul.f32 %v1064, %v1084
        %v1093 = vmul.f32 %v1065, %v1085
        %v1094 = vmul.f32 %v1090, %v1082
        %v1095 = vmul.f32 %v1091, %v1083
        %v1096 = vmul.f32 %v1092, %v1084
        %v1097 = vmul.f32 %v1093, %v1085
        %v1098 = vmul.f32 %v1094, %v1082
        %v1099 = vmul.f32 %v1095, %v1083
        %v1100 = vmul.f32 %v1096, %v1084
        %v1101 = vmul.f32 %v1097, %v1085
        %v1102 = vsub.f32 4.0, %v1098
        %v1103 = vsub.f32 4.0, %v1099
        %v1104 = vsub.f32 4.0, %v1100
        %v1105 = vsub.f32 4.0, %v1101
        %v1106 = vmul.f32 %v1082, %v1102
        %v1107 = vmul.f32 %v1083, %v1103
        %v1108 = vmul.f32 %v1084, %v1104
        %v1109 = vmul.f32 %v1085, %v1105
        %v1110 = vmul.f32 %v1106, 0.33333334
        %v1111 = vmul.f32 %v1107, 0.33333334
        %v1112 = vmul.f32 %v1108, 0.33333334
        %v1113 = vmul.f32 %v1109, 0.33333334
        %v1114 = vmul.f32 %v1062, %v1110
        %v1115 = vmul.f32 %v1063, %v1111
        %v1116 = vmul.f32 %v1064, %v1112
        %v1117 = vmul.f32 %v1065, %v1113
        %v1118 = vmul.f32 %v1114, %v1110
        %v1119 = vmul.f32 %v1115, %v1111
        %v1120 = vmul.f32 %v1116, %v1112
        %v1121 = vmul.f32 %v1117, %v1113
        %v1122 = vmul.f32 %v1118, %v1110
        %v1123 = vmul.f32 %v1119, %v1111
        %v1124 = vmul.f32 %v1120, %v1112
        %v1125 = vmul.f32 %v1121, %v1113
        %v1126 = vsub.f32 4.0, %v1122
        %v1127 = vsub.f32 4.0, %v1123
        %v1128 = vsub.f32 4.0, %v1124
        %v1129 = vsub.f32 4.0, %v1125
        %v1130 = vmul.f32 %v1110, %v1126
        %v1131 = vmul.f32 %v1111, %v1127
        %v1132 = vmul.f32 %v1112, %v1128
        %v1133 = vmul.f32 %v1113, %v1129
        %v1134 = vmul.f32 %v1130, 0.33333334
        %v1135 = vmul.f32 %v1131, 0.33333334
        %v1136 = vmul.f32 %v1132, 0.33333334
        %v1137 = vmul.f32 %v1133, 0.33333334
        %v1138 = vmul.f32 %v1062, %v1134
        %v1139 = vmul.f32 %v1063, %v1135
        %v1140 = vmul.f32 %v1064, %v1136
        %v1141 = vmul.f32 %v1065, %v1137
        %v1142 = vmul.f32 %v1138, %v1134
        %v1143 = vmul.f32 %v1139, %v1135
        %v1144 = vmul.f32 %v1140, %v1136
        %v1145 = vmul.f32 %v1141, %v1137
        %vm1146 = vcmp.gt.f32.partialorder %v1018, 0.008856
        %vm1147 = vcmp.gt.f32.partialorder %v1019, 0.008856
        %vm1148 = vcmp.gt.f32.partialorder %v1020, 0.008856
        %vm1149 = vcmp.gt.f32.partialorder %v1021, 0.008856
        %v1150 = vmul.f32 %v1018, 7.787
        %v1151 = vmul.f32 %v1019, 7.787
        %v1152 = vmul.f32 %v1020, 7.787
        %v1153 = vmul.f32 %v1021, 7.787
        %v1154 = vadd.f32 %v1150, 0.13793103
        %v1155 = vadd.f32 %v1151, 0.13793103
        %v1156 = vadd.f32 %v1152, 0.13793103
        %v1157 = vadd.f32 %v1153, 0.13793103
        %v1158 = vsel %vm1146, %v1142, %v1154
        %v1159 = vsel %vm1147, %v1143, %v1155
        %v1160 = vsel %vm1148, %v1144, %v1156
        %v1161 = vsel %vm1149, %v1145, %v1157
        %v1162 = vmax.f32 %v1038, 0.008856
        %v1163 = vmax.f32 %v1039, 0.008856
        %v1164 = vmax.f32 %v1040, 0.008856
        %v1165 = vmax.f32 %v1041, 0.008856
        %v1170 = vcvt.s32.f32 %v1162
        %v1171 = vcvt.s32.f32 %v1163
        %v1172 = vcvt.s32.f32 %v1164
        %v1173 = vcvt.s32.f32 %v1165
        %v1174 = vmul.f32 %v1170, 0.33333334
        %v1175 = vmul.f32 %v1171, 0.33333334
        %v1176 = vmul.f32 %v1172, 0.33333334
        %v1177 = vmul.f32 %v1173, 0.33333334
        %v1178 = vsub.f32 1.4199671e+09, %v1174
        %v1179 = vsub.f32 1.4199671e+09, %v1175
        %v1180 = vsub.f32 1.4199671e+09, %v1176
        %v1181 = vsub.f32 1.4199671e+09, %v1177
        %v1182 = vcvt.f32.s32.to.zero.pseudo %v1178
        %v1183 = vcvt.f32.s32.to.zero.pseudo %v1179
        %v1184 = vcvt.f32.s32.to.zero.pseudo %v1180
        %v1185 = vcvt.f32.s32.to.zero.pseudo %v1181
        %v1190 = vmul.f32 %v1162, %v1182
        %v1191 = vmul.f32 %v1163, %v1183
        %v1192 = vmul.f32 %v1164, %v1184
        %v1193 = vmul.f32 %v1165, %v1185
        %v1194 = vmul.f32 %v1190, %v1182
        %v1195 = vmul.f32 %v1191, %v1183
        %v1196 = vmul.f32 %v1192, %v1184
        %v1197 = vmul.f32 %v1193, %v1185
        %v1198 = vmul.f32 %v1194, %v1182
        %v1199 = vmul.f32 %v1195, %v1183
        %v1200 = vmul.f32 %v1196, %v1184
        %v1201 = vmul.f32 %v1197, %v1185
        %v1202 = vsub.f32 4.0, %v1198
        %v1203 = vsub.f32 4.0, %v1199
        %v1204 = vsub.f32 4.0, %v1200
        %v1205 = vsub.f32 4.0, %v1201
        %v1206 = vmul.f32 %v1182, %v1202
        %v1207 = vmul.f32 %v1183, %v1203
        %v1208 = vmul.f32 %v1184, %v1204
        %v1209 = vmul.f32 %v1185, %v1205
        %v1210 = vmul.f32 %v1206, 0.33333334
        %v1211 = vmul.f32 %v1207, 0.33333334
        %v1212 = vmul.f32 %v1208, 0.33333334
        %v1213 = vmul.f32 %v1209, 0.33333334
        %v1214 = vmul.f32 %v1162, %v1210
        %v1215 = vmul.f32 %v1163, %v1211
        %v1216 = vmul.f32 %v1164, %v1212
        %v1217 = vmul.f32 %v1165, %v1213
        %v1218 = vmul.f32 %v1214, %v1210
        %v1219 = vmul.f32 %v1215, %v1211
        %v1220 = vmul.f32 %v1216, %v1212
        %v1221 = vmul.f32 %v1217, %v1213
        %v1222 = vmul.f32 %v1218, %v1210
        %v1223 = vmul.f32 %v1219, %v1211
        %v1224 = vmul.f32 %v1220, %v1212
        %v1225 = vmul.f32 %v1221, %v1213
        %v1226 = vsub.f32 4.0, %v1222
        %v1227 = vsub.f32 4.0, %v1223
        %v1228 = vsub.f32 4.0, %v1224
        %v1229 = vsub.f32 4.0, %v1225
        %v1230 = vmul.f32 %v1210, %v1226
        %v1231 = vmul.f32 %v1211, %v1227
        %v1232 = vmul.f32 %v1212, %v1228
        %v1233 = vmul.f32 %v1213, %v1229
        %v1234 = vmul.f32 %v1230, 0.33333334
        %v1235 = vmul.f32 %v1231, 0.33333334
        %v1236 = vmul.f32 %v1232, 0.33333334
        %v1237 = vmul.f32 %v1233, 0.33333334
        %v1238 = vmul.f32 %v1162, %v1234
        %v1239 = vmul.f32 %v1163, %v1235
        %v1240 = vmul.f32 %v1164, %v1236
        %v1241 = vmul.f32 %v1165, %v1237
        %v1242 = vmul.f32 %v1238, %v1234
        %v1243 = vmul.f32 %v1239, %v1235
        %v1244 = vmul.f32 %v1240, %v1236
        %v1245 = vmul.f32 %v1241, %v1237
        %vm1246 = vcmp.gt.f32.partialorder %v1038, 0.008856
        %vm1247 = vcmp.gt.f32.partialorder %v1039, 0.008856
        %vm1248 = vcmp.gt.f32.partialorder %v1040, 0.008856
        %vm1249 = vcmp.gt.f32.partialorder %v1041, 0.008856
        %v1250 = vmul.f32 %v1038, 7.787
        %v1251 = vmul.f32 %v1039, 7.787
        %v1252 = vmul.f32 %v1040, 7.787
        %v1253 = vmul.f32 %v1041, 7.787
        %v1254 = vadd.f32 %v1250, 0.13793103
        %v1255 = vadd.f32 %v1251, 0.13793103
        %v1256 = vadd.f32 %v1252, 0.13793103
        %v1257 = vadd.f32 %v1253, 0.13793103
        %v1258 = vsel %vm1246, %v1242, %v1254
        %v1259 = vsel %vm1247, %v1243, %v1255
        %v1260 = vsel %vm1248, %v1244, %v1256
        %v1261 = vsel %vm1249, %v1245, %v1257
        %v1262 = vmax.f32 %v1058, 0.008856
        %v1263 = vmax.f32 %v1059, 0.008856
        %v1264 = vmax.f32 %v1060, 0.008856
        %v1265 = vmax.f32 %v1061, 0.008856
        %v1270 = vcvt.s32.f32 %v1262
        %v1271 = vcvt.s32.f32 %v1263
        %v1272 = vcvt.s32.f32 %v1264
        %v1273 = vcvt.s32.f32 %v1265
        %v1274 = vmul.f32 %v1270, 0.33333334
        %v1275 = vmul.f32 %v1271, 0.33333334
        %v1276 = vmul.f32 %v1272, 0.33333334
        %v1277 = vmul.f32 %v1273, 0.33333334
        %v1278 = vsub.f32 1.4199671e+09, %v1274
        %v1279 = vsub.f32 1.4199671e+09, %v1275
        %v1280 = vsub.f32 1.4199671e+09, %v1276
        %v1281 = vsub.f32 1.4199671e+09, %v1277
        %v1282 = vcvt.f32.s32.to.zero.pseudo %v1278
        %v1283 = vcvt.f32.s32.to.zero.pseudo %v1279
        %v1284 = vcvt.f32.s32.to.zero.pseudo %v1280
        %v1285 = vcvt.f32.s32.to.zero.pseudo %v1281
        %v1290 = vmul.f32 %v1262, %v1282
        %v1291 = vmul.f32 %v1263, %v1283
        %v1292 = vmul.f32 %v1264, %v1284
        %v1293 = vmul.f32 %v1265, %v1285
        %v1294 = vmul.f32 %v1290, %v1282
        %v1295 = vmul.f32 %v1291, %v1283
        %v1296 = vmul.f32 %v1292, %v1284
        %v1297 = vmul.f32 %v1293, %v1285
        %v1298 = vmul.f32 %v1294, %v1282
        %v1299 = vmul.f32 %v1295, %v1283
        %v1300 = vmul.f32 %v1296, %v1284
        %v1301 = vmul.f32 %v1297, %v1285
        %v1302 = vsub.f32 4.0, %v1298
        %v1303 = vsub.f32 4.0, %v1299
        %v1304 = vsub.f32 4.0, %v1300
        %v1305 = vsub.f32 4.0, %v1301
        %v1306 = vmul.f32 %v1282, %v1302
        %v1307 = vmul.f32 %v1283, %v1303
        %v1308 = vmul.f32 %v1284, %v1304
        %v1309 = vmul.f32 %v1285, %v1305
        %v1310 = vmul.f32 %v1306, 0.33333334
        %v1311 = vmul.f32 %v1307, 0.33333334
        %v1312 = vmul.f32 %v1308, 0.33333334
        %v1313 = vmul.f32 %v1309, 0.33333334
        %v1314 = vmul.f32 %v1262, %v1310
        %v1315 = vmul.f32 %v1263, %v1311
        %v1316 = vmul.f32 %v1264, %v1312
        %v1317 = vmul.f32 %v1265, %v1313
        %v1318 = vmul.f32 %v1314, %v1310
        %v1319 = vmul.f32 %v1315, %v1311
        %v1320 = vmul.f32 %v1316, %v1312
        %v1321 = vmul.f32 %v1317, %v1313
        %v1322 = vmul.f32 %v1318, %v1310
        %v1323 = vmul.f32 %v1319, %v1311
        %v1324 = vmul.f32 %v1320, %v1312
        %v1325 = vmul.f32 %v1321, %v1313
        %v1326 = vsub.f32 4.0, %v1322
        %v1327 = vsub.f32 4.0, %v1323
        %v1328 = vsub.f32 4.0, %v1324
        %v1329 = vsub.f32 4.0, %v1325
        %v1330 = vmul.f32 %v1310, %v1326
        %v1331 = vmul.f32 %v1311, %v1327
        %v1332 = vmul.f32 %v1312, %v1328
        %v1333 = vmul.f32 %v1313, %v1329
        %v1334 = vmul.f32 %v1330, 0.33333334
        %v1335 = vmul.f32 %v1331, 0.33333334
        %v1336 = vmul.f32 %v1332, 0.33333334
        %v1337 = vmul.f32 %v1333, 0.33333334
        %v1338 = vmul.f32 %v1262, %v1334
        %v1339 = vmul.f32 %v1263, %v1335
        %v1340 = vmul.f32 %v1264, %v1336
        %v1341 = vmul.f32 %v1265, %v1337
        %v1342 = vmul.f32 %v1338, %v1334
        %v1343 = vmul.f32 %v1339, %v1335
        %v1344 = vmul.f32 %v1340, %v1336
        %v1345 = vmul.f32 %v1341, %v1337
        %vm1346 = vcmp.gt.f32.partialorder %v1058, 0.008856
        %vm1347 = vcmp.gt.f32.partialorder %v1059, 0.008856
        %vm1348 = vcmp.gt.f32.partialorder %v1060, 0.008856
        %vm1349 = vcmp.gt.f32.partialorder %v1061, 0.008856
        %v1350 = vmul.f32 %v1058, 7.787
        %v1351 = vmul.f32 %v1059, 7.787
        %v1352 = vmul.f32 %v1060, 7.787
        %v1353 = vmul.f32 %v1061, 7.787
        %v1354 = vadd.f32 %v1350, 0.13793103
        %v1355 = vadd.f32 %v1351, 0.13793103
        %v1356 = vadd.f32 %v1352, 0.13793103
        %v1357 = vadd.f32 %v1353, 0.13793103
        %v1358 = vsel %vm1346, %v1342, %v1354
        %v1359 = vsel %vm1347, %v1343, %v1355
        %v1360 = vsel %vm1348, %v1344, %v1356
        %v1361 = vsel %vm1349, %v1345, %v1357
        %v1362 = vmul.f32 %v1258, 116.0
        %v1363 = vmul.f32 %v1259, 116.0
        %v1364 = vmul.f32 %v1260, 116.0
        %v1365 = vmul.f32 %v1261, 116.0
        %v1366 = vsub.f32 %v1362, 16.0
        %v1367 = vsub.f32 %v1363, 16.0
        %v1368 = vsub.f32 %v1364, 16.0
        %v1369 = vsub.f32 %v1365, 16.0
        %v1370 = vmul.f32 %v1038, 903.3
        %v1371 = vmul.f32 %v1039, 903.3
        %v1372 = vmul.f32 %v1040, 903.3
        %v1373 = vmul.f32 %v1041, 903.3
        %v1374 = vsel %vm1246, %v1366, %v1370
        %v1375 = vsel %vm1247, %v1367, %v1371
        %v1376 = vsel %vm1248, %v1368, %v1372
        %v1377 = vsel %vm1249, %v1369, %v1373
        %v1378 = vmul.f32 %v1374, 2.55
        %v1379 = vmul.f32 %v1375, 2.55
        %v1380 = vmul.f32 %v1376, 2.55
        %v1381 = vmul.f32 %v1377, 2.55
        %v1382 = vround.ne.pseudo %v1378
        %v1383 = vround.ne.pseudo %v1379
        %v1384 = vround.ne.pseudo %v1380
        %v1385 = vround.ne.pseudo %v1381
        %v1386 = vmax.f32 %v1382, 0.0
        %v1387 = vmax.f32 %v1383, 0.0
        %v1388 = vmax.f32 %v1384, 0.0
        %v1389 = vmax.f32 %v1385, 0.0
        %v1390 = vmin.f32 %v1386, 255.0
        %v1391 = vmin.f32 %v1387, 255.0
        %v1392 = vmin.f32 %v1388, 255.0
        %v1393 = vmin.f32 %v1389, 255.0
        %v1394 = vmax.f32 %v1390, 0.0
        %v1395 = vmax.f32 %v1391, 0.0
        %v1396 = vmax.f32 %v1392, 0.0
        %v1397 = vmax.f32 %v1393, 0.0
        %v1398 = vmin.f32 %v1394, 255.0
        %v1399 = vmin.f32 %v1395, 255.0
        %v1400 = vmin.f32 %v1396, 255.0
        %v1401 = vmin.f32 %v1397, 255.0
        %v1402 = vcvt.f32.s32.to.zero.pseudo %v1398
        %v1403 = vcvt.f32.s32.to.zero.pseudo %v1399
        %v1404 = vcvt.f32.s32.to.zero.pseudo %v1400
        %v1405 = vcvt.f32.s32.to.zero.pseudo %v1401
        %v1406 = vpack.c.b16 %v1403, %v1402
        %v1407 = vpack.c.b16 %v1405, %v1404
        %v1408 = vpack.c.b8 %v1407, %v1406
        %s1409 = scalar_lea.vmem %s152, 72 [#allocation5]
        %1410 = vst [vmem:[%s1409] sm:$0xff] %v1408
        %v1411 = vsub.f32 %v1158, %v1258
        %v1412 = vsub.f32 %v1159, %v1259
        %v1413 = vsub.f32 %v1160, %v1260
        %v1414 = vsub.f32 %v1161, %v1261
        %v1415 = vmul.f32 %v1411, 500.0
        %v1416 = vmul.f32 %v1412, 500.0
        %v1417 = vmul.f32 %v1413, 500.0
        %v1418 = vmul.f32 %v1414, 500.0
        %v1419 = vadd.f32 %v1415, 128.0
        %v1420 = vadd.f32 %v1416, 128.0
        %v1421 = vadd.f32 %v1417, 128.0
        %v1422 = vadd.f32 %v1418, 128.0
        %v1423 = vround.ne.pseudo %v1419
        %v1424 = vround.ne.pseudo %v1420
        %v1425 = vround.ne.pseudo %v1421
        %v1426 = vround.ne.pseudo %v1422
        %v1427 = vmax.f32 %v1423, 0.0
        %v1428 = vmax.f32 %v1424, 0.0
        %v1429 = vmax.f32 %v1425, 0.0
        %v1430 = vmax.f32 %v1426, 0.0
        %v1431 = vmin.f32 %v1427, 255.0
        %v1432 = vmin.f32 %v1428, 255.0
        %v1433 = vmin.f32 %v1429, 255.0
        %v1434 = vmin.f32 %v1430, 255.0
        %v1435 = vmax.f32 %v1431, 0.0
        %v1436 = vmax.f32 %v1432, 0.0
        %v1437 = vmax.f32 %v1433, 0.0
        %v1438 = vmax.f32 %v1434, 0.0
        %v1439 = vmin.f32 %v1435, 255.0
        %v1440 = vmin.f32 %v1436, 255.0
        %v1441 = vmin.f32 %v1437, 255.0
        %v1442 = vmin.f32 %v1438, 255.0
        %v1443 = vcvt.f32.s32.to.zero.pseudo %v1439
        %v1444 = vcvt.f32.s32.to.zero.pseudo %v1440
        %v1445 = vcvt.f32.s32.to.zero.pseudo %v1441
        %v1446 = vcvt.f32.s32.to.zero.pseudo %v1442
        %v1447 = vpack.c.b16 %v1444, %v1443
        %v1448 = vpack.c.b16 %v1446, %v1445
        %v1449 = vpack.c.b8 %v1448, %v1447
        %s1450 = scalar_lea.vmem %s152, 80 [#allocation5]
        %1451 = vst [vmem:[%s1450] sm:$0xff] %v1449
        %v1452 = vsub.f32 %v1258, %v1358
        %v1453 = vsub.f32 %v1259, %v1359
        %v1454 = vsub.f32 %v1260, %v1360
        %v1455 = vsub.f32 %v1261, %v1361
        %v1456 = vmul.f32 %v1452, 200.0
        %v1457 = vmul.f32 %v1453, 200.0
        %v1458 = vmul.f32 %v1454, 200.0
        %v1459 = vmul.f32 %v1455, 200.0
        %v1460 = vadd.f32 %v1456, 128.0
        %v1461 = vadd.f32 %v1457, 128.0
        %v1462 = vadd.f32 %v1458, 128.0
        %v1463 = vadd.f32 %v1459, 128.0
        %v1464 = vround.ne.pseudo %v1460
        %v1465 = vround.ne.pseudo %v1461
        %v1466 = vround.ne.pseudo %v1462
        %v1467 = vround.ne.pseudo %v1463
        %v1468 = vmax.f32 %v1464, 0.0
        %v1469 = vmax.f32 %v1465, 0.0
        %v1470 = vmax.f32 %v1466, 0.0
        %v1471 = vmax.f32 %v1467, 0.0
        %v1472 = vmin.f32 %v1468, 255.0
        %v1473 = vmin.f32 %v1469, 255.0
        %v1474 = vmin.f32 %v1470, 255.0
        %v1475 = vmin.f32 %v1471, 255.0
        %v1476 = vmax.f32 %v1472, 0.0
        %v1477 = vmax.f32 %v1473, 0.0
        %v1478 = vmax.f32 %v1474, 0.0
        %v1479 = vmax.f32 %v1475, 0.0
        %v1480 = vmin.f32 %v1476, 255.0
        %v1481 = vmin.f32 %v1477, 255.0
        %v1482 = vmin.f32 %v1478, 255.0
        %v1483 = vmin.f32 %v1479, 255.0
        %v1484 = vcvt.f32.s32.to.zero.pseudo %v1480
        %v1485 = vcvt.f32.s32.to.zero.pseudo %v1481
        %v1486 = vcvt.f32.s32.to.zero.pseudo %v1482
        %v1487 = vcvt.f32.s32.to.zero.pseudo %v1483
        %v1488 = vpack.c.b16 %v1485, %v1484
        %v1489 = vpack.c.b16 %v1487, %v1486
        %v1490 = vpack.c.b8 %v1489, %v1488
        %s1491 = scalar_lea.vmem %s152, 88 [#allocation5]
        %1492 = vst [vmem:[%s1491] sm:$0xff] %v1490
        %s1493 = sand.u32 %s68, 1
        %s1494 = scalar_lea.sflag [#allocation4], %s1493
        %s1495 = sand.u32 %s68, 1
        %s1496 = smul.addr %s1495, 96
        %s1497 = scalar_lea.vmem [#allocation5], %s1496
        // Predicated region
        $region29: #{tpu_custom_call.1} parent=23 // pred_check
          %p1498 = pneg %p78
        $region30: #{tpu_custom_call.1} parent=23 // pred_check_branch
          %1500 = sbr.rel (%p1498) target = $region32
        $region31: #{tpu_custom_call.1} parent=23 // pred_region
          %s1502 = ssub.s32 1536, 1536
          %1503 = vsyncadd %s1494, %s1502
          %s1504 = smul.addr %s22, 2
          %s1505 = sadd.s32 %s23, %s1504
          %s1506 = smul.addr %s1505, 128
          %s1507 = scalar_lea.hbm %s1, %s1506
          %s1508 = sshll.u32 %s1497, 4
          %s1509 = int_to_ptr.vmem [resolvable:$true] %s1508
          %1514 = dma.vmem_to_hbm [thread:$0]  %s1509, 1536, %s1507, %s1494, 128, 768, 8
        $region32: #{tpu_custom_call.1} parent=23 // pred_fallthru
          _
      $region24: #{tpu_custom_call.1} parent=5 // pred_fallthru
        _
      %p1515 = scmp.le.s32.totalorder 2, %s13
      // Predicated region
      $region33: #{tpu_custom_call.1} parent=5 // pred_check
        %p1516 = pneg %p1515
      $region34: #{tpu_custom_call.1} parent=5 // pred_check_branch
        %1518 = sbr.rel (%p1516) target = $region36
      $region35: #{tpu_custom_call.1} parent=5 // pred_region
        %s1519 = ssub.s32 %s13, 2
        // Predicated region
        $region37: #{tpu_custom_call.1} parent=35 // pred_check
          %p1520 = pneg %p84
        $region38: #{tpu_custom_call.1} parent=35 // pred_check_branch
          %1522 = sbr.rel (%p1520) target = $region40
        $region39: #{tpu_custom_call.1} parent=35 // pred_region
          %s1523 = sand.u32 %s69, 1
          %s1524 = scalar_lea.sflag [#allocation4], %s1523
          %s1525 = sand.u32 %s69, 1
          %s1526 = smul.addr %s1525, 96
          %s1527 = scalar_lea.vmem [#allocation5], %s1526
          %1528 = dma.done %s1524, 1536
        $region40: #{tpu_custom_call.1} parent=35 // pred_fallthru
          _
      $region36: #{tpu_custom_call.1} parent=5 // pred_fallthru
        _
    $region6: #{tpu_custom_call.1} parent=1 // loop_footer
      %s17 = sadd.s32 1, %s13
    $region7: #{tpu_custom_call.1} parent=1 // loop_footer_branch
      %12 = sbr.rel target = $region3
    $region8: #{tpu_custom_call.1} parent=1 // loop_exit
      _
    %1529 = vsyncpa [#allocation3], 1
    %s1530 = scalar_lea.sflag [#allocation3], 1
    %1531 = vsyncpa %s1530, 1
    %1532 = vsyncpa [#allocation4], 1
    %s1533 = scalar_lea.sflag [#allocation4], 1
    %1534 = vsyncpa %s1533, 1

</llo_original>
